<compile_context>
chip_gen: v7x
topology: tpu7x:2x2x1
jax: 0.10.0
libtpu: 0.0.40
codegen_flags: <defaults>
</compile_context>

<pallas_src>
import math
from dataclasses import dataclass
from functools import partial

import numpy as np
import jax
import jax.numpy as jnp
from jax.experimental import pallas as pl
from jax.experimental.pallas import tpu as pltpu


# ----------------------------- model config ---------------------------------
@dataclass
class ModelArgs:
    dim: int = 33                 # Lorentz dim (1 time + 32 space)
    inter_dim: int = 64
    n_heads: int = 2
    n_dense_layers: int = 1       # layer_id=0 < n_dense_layers -> dense FFN
    q_lora_rank: int = 0
    kv_lora_rank: int = 16
    qk_nope_head_dim: int = 16
    qk_rope_head_dim: int = 8
    v_head_dim: int = 16
    rope_theta: float = 10000.0
    k: float = 1.0                # manifold curvature


def _full_spec(shape):
    nd = len(shape)
    return pl.BlockSpec(shape, lambda i, nd=nd: (0,) * nd)


# ----------------------------- fused block kernel ----------------------------
def _block_kernel(xt_ref, xs_ref, mask_ref, cos_ref, sin_ref, rotp_ref,
                  attn_nw_ref, wq_kva_ref, kv_nw_ref, wkv_b_ref, wo_ref,
                  ffn_nw_ref, w13_ref, w2_ref,
                  ot_ref, os_ref,
                  *, B, S, H, nope, rope, vdim, kv_lora, inter,
                  k_curv, res_scale, eps):
    f32 = jnp.float32
    inv_k = 1.0 / k_curv
    sqrt_k = math.sqrt(k_curv)
    w_y = 1.0 / res_scale

    xt = xt_ref[...].astype(f32)            # (N, 1)   Lorentz time coord
    xs = xs_ref[...].astype(f32)            # (N, dm1) spatial coords
    mask = mask_ref[...].astype(f32)        # (S, S)
    cos_e = cos_ref[...].astype(f32)        # (N, rope) expanded rotary cos
    sin_e = sin_ref[...].astype(f32)        # (N, rope) expanded rotary sin
    rotp = rotp_ref[...].astype(f32)        # (rope, rope) pairwise (re,im) swap

    # ---------------- attention branch ----------------
    # LorentzRMSNorm (attn_norm): normalize spatial coords (time re-lift unused
    # because MLA only consumes the spatial part).
    ms = jnp.mean(xs * xs, axis=-1, keepdims=True)
    hns = xs * jax.lax.rsqrt(ms + eps) * attn_nw_ref[...]          # (N, dm1)

    # fused [wq | wkv_a] projection — one MXU push instead of two
    qkv = jnp.dot(hns, wq_kva_ref[...], preferred_element_type=f32)
    q_dim = H * (nope + rope)
    q_all = qkv[:, :q_dim]                                         # (N, H*(nope+rope))
    kv_lat = qkv[:, q_dim:q_dim + kv_lora]                         # (N, kv_lora)
    k_rope = qkv[:, q_dim + kv_lora:q_dim + kv_lora + rope]        # (N, rope)

    # kv_norm (plain RMSNorm on the latent)
    ms_kv = jnp.mean(kv_lat * kv_lat, axis=-1, keepdims=True)
    kv_lat = kv_lat * jax.lax.rsqrt(ms_kv + eps) * kv_nw_ref[...]

    kvb = jnp.dot(kv_lat, wkv_b_ref[...], preferred_element_type=f32)  # (N, H*(nope+vdim))

    # rotary on shared k_rope (interleaved / view_as_complex convention):
    #   y = x*cos + (x @ P)*sin   where (x@P)[2i] = -x[2i+1], (x@P)[2i+1] = x[2i]
    kr = (k_rope * cos_e
          + jnp.dot(k_rope, rotp, preferred_element_type=f32) * sin_e)

    scale = 1.0 / math.sqrt(nope + rope)
    attn_sp = None
    for h in range(H):                       # H=2 — static unrolled, no grid overhead
        bq = h * (nope + rope)
        q_nope_h = q_all[:, bq:bq + nope]                          # (N, nope)
        q_rope_h = q_all[:, bq + nope:bq + nope + rope]            # (N, rope)
        q_rope_h = (q_rope_h * cos_e
                    + jnp.dot(q_rope_h, rotp, preferred_element_type=f32) * sin_e)
        bk = h * (nope + vdim)
        k_nope_h = kvb[:, bk:bk + nope]                            # (N, nope)
        v_h = kvb[:, bk + nope:bk + nope + vdim]                   # (N, vdim)

        o_rows = []
        for b in range(B):                   # B=2 — static unrolled
            r0 = b * S
            qn = q_nope_h[r0:r0 + S]
            qr = q_rope_h[r0:r0 + S]
            kn = k_nope_h[r0:r0 + S]
            krb = kr[r0:r0 + S]
            vb = v_h[r0:r0 + S]
            # scores = q_nope @ k_nope^T + q_rope @ k_rope^T  (avoids lane concat)
            s = (jax.lax.dot_general(qn, kn, (((1,), (1,)), ((), ())),
                                     preferred_element_type=f32)
                 + jax.lax.dot_general(qr, krb, (((1,), (1,)), ((), ())),
                                       preferred_element_type=f32))
            s = s * scale + mask
            s = s - jnp.max(s, axis=-1, keepdims=True)
            p = jnp.exp(s)
            p = p / jnp.sum(p, axis=-1, keepdims=True)
            o_rows.append(jnp.dot(p, vb, preferred_element_type=f32))   # (S, vdim)
        o_h = jnp.concatenate(o_rows, axis=0)                      # (N, vdim)

        # per-head output projection, accumulated (no lane-offset concat of heads)
        w_h = wo_ref[h * vdim:(h + 1) * vdim, :]                   # (vdim, dm1)
        c = jnp.dot(o_h, w_h, preferred_element_type=f32)          # (N, dm1)
        attn_sp = c if attn_sp is None else attn_sp + c

    # Lorentz lift of the attention output
    attn_t = jnp.sqrt(inv_k + jnp.sum(attn_sp * attn_sp, axis=-1, keepdims=True))

    # LResNet #1:  z = x + y/scale, renormalize onto the manifold
    zs = xs + w_y * attn_sp
    zt = xt + w_y * attn_t
    inner = jnp.sum(zs * zs, axis=-1, keepdims=True) - zt * zt
    denom = sqrt_k * jnp.sqrt(jnp.maximum(-inner, 1e-8))
    hs = zs / denom
    ht = zt / denom

    # ---------------- feed-forward branch ----------------
    ms_f = jnp.mean(hs * hs, axis=-1, keepdims=True)
    fns = hs * jax.lax.rsqrt(ms_f + eps) * ffn_nw_ref[...]         # (N, dm1)

    # fused [w1 | w3] — single (dm1, 2*inter) matmul, 128-lane-wide output
    ab = jnp.dot(fns, w13_ref[...], preferred_element_type=f32)    # (N, 2*inter)
    a = ab[:, :inter]
    g = ab[:, inter:]
    hmid = a * (1.0 / (1.0 + jnp.exp(-a))) * g                     # silu(a) * g
    ys = jnp.dot(hmid, w2_ref[...], preferred_element_type=f32)    # (N, dm1)
    yt = jnp.sqrt(inv_k + jnp.sum(ys * ys, axis=-1, keepdims=True))

    # LResNet #2
    zs2 = hs + w_y * ys
    zt2 = ht + w_y * yt
    inner2 = jnp.sum(zs2 * zs2, axis=-1, keepdims=True) - zt2 * zt2
    denom2 = sqrt_k * jnp.sqrt(jnp.maximum(-inner2, 1e-8))
    os_ref[...] = (zs2 / denom2).astype(os_ref.dtype)
    ot_ref[...] = (zt2 / denom2).astype(ot_ref.dtype)


# ----------------------------- wrapper ----------------------------------------
def block_forward(params, args, x, start_pos, cos, sin, mask):
    assert start_pos == 0  # TODO(synk): KV-cache decode (start_pos>0) path omitted
    B, S, D = x.shape
    N = B * S
    dm1 = D - 1
    H = args.n_heads
    nope, rope, vdim = args.qk_nope_head_dim, args.qk_rope_head_dim, args.v_head_dim
    kv_lora, inter = args.kv_lora_rank, args.inter_dim

    x2 = x.reshape(N, D)
    xt = x2[:, 0:1]                                        # time coord  (N, 1)
    xs = x2[:, 1:]                                         # spatial     (N, dm1)

    # rotary tables expanded to (N, rope), row-aligned with the flattened tokens
    cos_e = jnp.tile(jnp.repeat(cos, 2, axis=-1), (B, 1))
    sin_e = jnp.tile(jnp.repeat(sin, 2, axis=-1), (B, 1))
    # pairwise (re, im) swap matrix for interleaved rotary
    P_np = np.zeros((rope, rope), np.float32)
    for i in range(rope // 2):
        P_np[2 * i + 1, 2 * i] = -1.0
        P_np[2 * i, 2 * i + 1] = 1.0
    rotp = jnp.asarray(P_np)

    # fuse projection weights (constant-folded under jit)
    wq_kva = jnp.concatenate([params["wq"], params["wkv_a"]], axis=1)
    w13 = jnp.concatenate([params["w1"], params["w3"]], axis=1)

    kernel = partial(_block_kernel, B=B, S=S, H=H, nope=nope, rope=rope,
                     vdim=vdim, kv_lora=kv_lora, inter=inter,
                     k_curv=args.k, res_scale=math.sqrt(args.dim), eps=1e-6)

    inputs = (xt, xs, mask, cos_e, sin_e, rotp,
              params["attn_norm_w"], wq_kva, params["kv_norm_w"],
              params["wkv_b"], params["wo"],
              params["ffn_norm_w"], w13, params["w2"])

    ot, osp = pl.pallas_call(
        kernel,
        out_shape=(jax.ShapeDtypeStruct((N, 1), jnp.float32),
                   jax.ShapeDtypeStruct((N, dm1), jnp.float32)),
        grid=(1,),
        in_specs=[_full_spec(a.shape) for a in inputs],
        out_specs=[_full_spec((N, 1)), _full_spec((N, dm1))],
    )(*inputs)

    return jnp.concatenate([ot, osp], axis=-1).reshape(B, S, D)


# ----------------------------- rotary / params --------------------------------
def precompute_freqs(args, seqlen):
    rd = args.qk_rope_head_dim
    freqs = 1.0 / (args.rope_theta **
                   (jnp.arange(0, rd, 2, dtype=jnp.float32) / rd))
    t = jnp.arange(seqlen, dtype=jnp.float32)
    ang = jnp.outer(t, freqs)                               # (S, rd//2)
    return jnp.cos(ang), jnp.sin(ang)


def init_params(key, args):
    dm1, H = args.dim - 1, args.n_heads
    qk_head = args.qk_nope_head_dim + args.qk_rope_head_dim
    ks = jax.random.split(key, 7)

    def lin(k, fi, fo):
        return jax.random.normal(k, (fi, fo), jnp.float32) / math.sqrt(fi)

    return dict(
        attn_norm_w=jnp.ones((1, dm1), jnp.float32),
        ffn_norm_w=jnp.ones((1, dm1), jnp.float32),
        wq=lin(ks[0], dm1, H * qk_head),
        wkv_a=lin(ks[1], dm1, args.kv_lora_rank + args.qk_rope_head_dim),
        kv_norm_w=jnp.ones((1, args.kv_lora_rank), jnp.float32),
        wkv_b=lin(ks[2], args.kv_lora_rank,
                  H * (args.qk_nope_head_dim + args.v_head_dim)),
        wo=lin(ks[3], H * args.v_head_dim, dm1),
        w1=lin(ks[4], dm1, args.inter_dim),
        w3=lin(ks[5], dm1, args.inter_dim),
        w2=lin(ks[6], args.inter_dim, dm1),
    )


# ----------------------------- main -------------------------------------------
if __name__ == "__main__":
    args = ModelArgs()
    B, S = 2, 8

    key = jax.random.PRNGKey(0)
    kp, kx = jax.random.split(key)
    params = init_params(kp, args)

    # deterministic input on the Lorentz manifold
    space = 0.5 * jax.random.normal(kx, (B, S, args.dim - 1), jnp.float32)
    time = jnp.sqrt(1.0 / args.k + jnp.sum(space * space, axis=-1, keepdims=True))
    x = jnp.concatenate([time, space], axis=-1)             # (B, S, dim)

    cos, sin = precompute_freqs(args, S)
    causal = jnp.arange(S)[None, :] <= jnp.arange(S)[:, None]
    mask = jnp.where(causal, 0.0, -1e9).astype(jnp.float32)

    fwd = jax.jit(lambda x, cos, sin, mask:
                  block_forward(params, args, x, 0, cos, sin, mask))
    out = jax.block_until_ready(fwd(x, cos, sin, mask))

    assert out.shape == (B, S, args.dim)
    assert bool(jnp.all(jnp.isfinite(out)))
    # output lies on the manifold: <o,o>_L ≈ -1/k
    inner = jnp.sum(out[..., 1:] ** 2, -1) - out[..., 0] ** 2
    assert bool(jnp.all(jnp.abs(inner + 1.0 / args.k) < 1e-3))
    print("KERNEL_OK")
</pallas_src>

<mosaic_0001>
module attributes {stable_mosaic.version = 11 : i64} {
  func.func @_block_kernel(%arg0: i32, %arg1: memref<16x1xf32, #tpu.memory_space<vmem>>, %arg2: memref<16x32xf32, #tpu.memory_space<vmem>>, %arg3: memref<8x8xf32, #tpu.memory_space<vmem>>, %arg4: memref<16x8xf32, #tpu.memory_space<vmem>>, %arg5: memref<16x8xf32, #tpu.memory_space<vmem>>, %arg6: memref<8x8xf32, #tpu.memory_space<vmem>>, %arg7: memref<1x32xf32, #tpu.memory_space<vmem>>, %arg8: memref<32x72xf32, #tpu.memory_space<vmem>>, %arg9: memref<1x16xf32, #tpu.memory_space<vmem>>, %arg10: memref<16x64xf32, #tpu.memory_space<vmem>>, %arg11: memref<32x32xf32, #tpu.memory_space<vmem>>, %arg12: memref<1x32xf32, #tpu.memory_space<vmem>>, %arg13: memref<32x128xf32, #tpu.memory_space<vmem>>, %arg14: memref<64x32xf32, #tpu.memory_space<vmem>>, %arg15: memref<16x1xf32, #tpu.memory_space<vmem>>, %arg16: memref<16x32xf32, #tpu.memory_space<vmem>>) attributes {dimension_semantics = [#tpu.dimension_semantics<arbitrary>], iteration_bounds = array<i64: 1>, scalar_prefetch = 0 : i64, scratch_operands = 0 : i64, tpu.core_type = #tpu.core_type<tc>, window_params = [{pipeline_mode = #tpu.pipeline_mode<synchronous>, transform_indices = @transform_0, window_bounds = array<i64: 16, 1>}, {pipeline_mode = #tpu.pipeline_mode<synchronous>, transform_indices = @transform_1, window_bounds = array<i64: 16, 32>}, {pipeline_mode = #tpu.pipeline_mode<synchronous>, transform_indices = @transform_2, window_bounds = array<i64: 8, 8>}, {pipeline_mode = #tpu.pipeline_mode<synchronous>, transform_indices = @transform_3, window_bounds = array<i64: 16, 8>}, {pipeline_mode = #tpu.pipeline_mode<synchronous>, transform_indices = @transform_4, window_bounds = array<i64: 16, 8>}, {pipeline_mode = #tpu.pipeline_mode<synchronous>, transform_indices = @transform_5, window_bounds = array<i64: 8, 8>}, {pipeline_mode = #tpu.pipeline_mode<synchronous>, transform_indices = @transform_6, window_bounds = array<i64: 1, 32>}, {pipeline_mode = #tpu.pipeline_mode<synchronous>, transform_indices = @transform_7, window_bounds = array<i64: 32, 72>}, {pipeline_mode = #tpu.pipeline_mode<synchronous>, transform_indices = @transform_8, window_bounds = array<i64: 1, 16>}, {pipeline_mode = #tpu.pipeline_mode<synchronous>, transform_indices = @transform_9, window_bounds = array<i64: 16, 64>}, {pipeline_mode = #tpu.pipeline_mode<synchronous>, transform_indices = @transform_10, window_bounds = array<i64: 32, 32>}, {pipeline_mode = #tpu.pipeline_mode<synchronous>, transform_indices = @transform_11, window_bounds = array<i64: 1, 32>}, {pipeline_mode = #tpu.pipeline_mode<synchronous>, transform_indices = @transform_12, window_bounds = array<i64: 32, 128>}, {pipeline_mode = #tpu.pipeline_mode<synchronous>, transform_indices = @transform_13, window_bounds = array<i64: 64, 32>}, {pipeline_mode = #tpu.pipeline_mode<synchronous>, transform_indices = @transform_14, window_bounds = array<i64: 16, 1>}, {pipeline_mode = #tpu.pipeline_mode<synchronous>, transform_indices = @transform_15, window_bounds = array<i64: 16, 32>}]} {
    %c0 = arith.constant 0 : index
    %c0_0 = arith.constant 0 : index
    %0 = vector.load %arg1[%c0, %c0_0] : memref<16x1xf32, #tpu.memory_space<vmem>>, vector<16x1xf32>
    %c0_1 = arith.constant 0 : index
    %c0_2 = arith.constant 0 : index
    %1 = vector.load %arg2[%c0_1, %c0_2] : memref<16x32xf32, #tpu.memory_space<vmem>>, vector<16x32xf32>
    %c0_3 = arith.constant 0 : index
    %c0_4 = arith.constant 0 : index
    %2 = vector.load %arg3[%c0_3, %c0_4] : memref<8x8xf32, #tpu.memory_space<vmem>>, vector<8x8xf32>
    %c0_5 = arith.constant 0 : index
    %c0_6 = arith.constant 0 : index
    %3 = vector.load %arg4[%c0_5, %c0_6] : memref<16x8xf32, #tpu.memory_space<vmem>>, vector<16x8xf32>
    %c0_7 = arith.constant 0 : index
    %c0_8 = arith.constant 0 : index
    %4 = vector.load %arg5[%c0_7, %c0_8] : memref<16x8xf32, #tpu.memory_space<vmem>>, vector<16x8xf32>
    %c0_9 = arith.constant 0 : index
    %c0_10 = arith.constant 0 : index
    %5 = vector.load %arg6[%c0_9, %c0_10] : memref<8x8xf32, #tpu.memory_space<vmem>>, vector<8x8xf32>
    %6 = arith.mulf %1, %1 : vector<16x32xf32>
    %cst = arith.constant dense<0.000000e+00> : vector<16xf32>
    %7 = vector.multi_reduction <add>, %6, %cst [1] : vector<16x32xf32> to vector<16xf32>
    %8 = vector.shape_cast %7 : vector<16xf32> to vector<16x1xf32>
    %cst_11 = arith.constant 3.200000e+01 : f32
    %9 = vector.broadcast %cst_11 : f32 to vector<16x1xf32>
    %10 = arith.divf %8, %9 : vector<16x1xf32>
    %cst_12 = arith.constant 9.99999997E-7 : f32
    %11 = vector.broadcast %cst_12 : f32 to vector<16x1xf32>
    %12 = arith.addf %10, %11 : vector<16x1xf32>
    %13 = math.rsqrt %12 : vector<16x1xf32>
    %14 = vector.broadcast %13 : vector<16x1xf32> to vector<16x32xf32>
    %15 = arith.mulf %1, %14 : vector<16x32xf32>
    %c0_13 = arith.constant 0 : index
    %c0_14 = arith.constant 0 : index
    %16 = vector.load %arg7[%c0_13, %c0_14] : memref<1x32xf32, #tpu.memory_space<vmem>>, vector<1x32xf32>
    %17 = vector.broadcast %16 : vector<1x32xf32> to vector<16x32xf32>
    %18 = arith.mulf %15, %17 : vector<16x32xf32>
    %c0_15 = arith.constant 0 : index
    %c0_16 = arith.constant 0 : index
    %19 = vector.load %arg8[%c0_15, %c0_16] : memref<32x72xf32, #tpu.memory_space<vmem>>, vector<32x72xf32>
    %cst_17 = arith.constant dense<0.000000e+00> : vector<16x72xf32>
    %20 = tpu.matmul %18, %19, %cst_17 {dimension_numbers = #tpu.dot_dimension_numbers<[1], [0], [0], [1], [0, 0, 1, 1], [], []>} : vector<16x32xf32>, vector<32x72xf32>, vector<16x72xf32> -> vector<16x72xf32>
    %21 = vector.extract_strided_slice %20 {offsets = [0, 0], sizes = [16, 48], strides = [1, 1]} : vector<16x72xf32> to vector<16x48xf32>
    %22 = vector.extract_strided_slice %20 {offsets = [0, 48], sizes = [16, 16], strides = [1, 1]} : vector<16x72xf32> to vector<16x16xf32>
    %23 = vector.extract_strided_slice %20 {offsets = [0, 64], sizes = [16, 8], strides = [1, 1]} : vector<16x72xf32> to vector<16x8xf32>
    %24 = arith.mulf %22, %22 : vector<16x16xf32>
    %cst_18 = arith.constant dense<0.000000e+00> : vector<16xf32>
    %25 = vector.multi_reduction <add>, %24, %cst_18 [1] : vector<16x16xf32> to vector<16xf32>
    %26 = vector.shape_cast %25 : vector<16xf32> to vector<16x1xf32>
    %cst_19 = arith.constant 1.600000e+01 : f32
    %27 = vector.broadcast %cst_19 : f32 to vector<16x1xf32>
    %28 = arith.divf %26, %27 : vector<16x1xf32>
    %cst_20 = arith.constant 9.99999997E-7 : f32
    %29 = vector.broadcast %cst_20 : f32 to vector<16x1xf32>
    %30 = arith.addf %28, %29 : vector<16x1xf32>
    %31 = math.rsqrt %30 : vector<16x1xf32>
    %32 = vector.broadcast %31 : vector<16x1xf32> to vector<16x16xf32>
    %33 = arith.mulf %22, %32 : vector<16x16xf32>
    %c0_21 = arith.constant 0 : index
    %c0_22 = arith.constant 0 : index
    %34 = vector.load %arg9[%c0_21, %c0_22] : memref<1x16xf32, #tpu.memory_space<vmem>>, vector<1x16xf32>
    %35 = vector.broadcast %34 : vector<1x16xf32> to vector<16x16xf32>
    %36 = arith.mulf %33, %35 : vector<16x16xf32>
    %c0_23 = arith.constant 0 : index
    %c0_24 = arith.constant 0 : index
    %37 = vector.load %arg10[%c0_23, %c0_24] : memref<16x64xf32, #tpu.memory_space<vmem>>, vector<16x64xf32>
    %cst_25 = arith.constant dense<0.000000e+00> : vector<16x64xf32>
    %38 = tpu.matmul %36, %37, %cst_25 {dimension_numbers = #tpu.dot_dimension_numbers<[1], [0], [0], [1], [0, 0, 1, 1], [], []>} : vector<16x16xf32>, vector<16x64xf32>, vector<16x64xf32> -> vector<16x64xf32>
    %39 = arith.mulf %23, %3 : vector<16x8xf32>
    %cst_26 = arith.constant dense<0.000000e+00> : vector<16x8xf32>
    %40 = tpu.matmul %23, %5, %cst_26 {dimension_numbers = #tpu.dot_dimension_numbers<[1], [0], [0], [1], [0, 0, 1, 1], [], []>} : vector<16x8xf32>, vector<8x8xf32>, vector<16x8xf32> -> vector<16x8xf32>
    %41 = arith.mulf %40, %4 : vector<16x8xf32>
    %42 = arith.addf %39, %41 : vector<16x8xf32>
    %43 = vector.extract_strided_slice %21 {offsets = [0, 0], sizes = [16, 16], strides = [1, 1]} : vector<16x48xf32> to vector<16x16xf32>
    %44 = vector.extract_strided_slice %21 {offsets = [0, 16], sizes = [16, 8], strides = [1, 1]} : vector<16x48xf32> to vector<16x8xf32>
    %45 = arith.mulf %44, %3 : vector<16x8xf32>
    %cst_27 = arith.constant dense<0.000000e+00> : vector<16x8xf32>
    %46 = tpu.matmul %44, %5, %cst_27 {dimension_numbers = #tpu.dot_dimension_numbers<[1], [0], [0], [1], [0, 0, 1, 1], [], []>} : vector<16x8xf32>, vector<8x8xf32>, vector<16x8xf32> -> vector<16x8xf32>
    %47 = arith.mulf %46, %4 : vector<16x8xf32>
    %48 = arith.addf %45, %47 : vector<16x8xf32>
    %49 = vector.extract_strided_slice %38 {offsets = [0, 0], sizes = [16, 16], strides = [1, 1]} : vector<16x64xf32> to vector<16x16xf32>
    %50 = vector.extract_strided_slice %38 {offsets = [0, 16], sizes = [16, 16], strides = [1, 1]} : vector<16x64xf32> to vector<16x16xf32>
    %51 = vector.extract_strided_slice %43 {offsets = [0, 0], sizes = [8, 16], strides = [1, 1]} : vector<16x16xf32> to vector<8x16xf32>
    %52 = vector.extract_strided_slice %48 {offsets = [0, 0], sizes = [8, 8], strides = [1, 1]} : vector<16x8xf32> to vector<8x8xf32>
    %53 = vector.extract_strided_slice %49 {offsets = [0, 0], sizes = [8, 16], strides = [1, 1]} : vector<16x16xf32> to vector<8x16xf32>
    %54 = vector.extract_strided_slice %42 {offsets = [0, 0], sizes = [8, 8], strides = [1, 1]} : vector<16x8xf32> to vector<8x8xf32>
    %55 = vector.extract_strided_slice %50 {offsets = [0, 0], sizes = [8, 16], strides = [1, 1]} : vector<16x16xf32> to vector<8x16xf32>
    %cst_28 = arith.constant dense<0.000000e+00> : vector<8x8xf32>
    %56 = tpu.matmul %51, %53, %cst_28 {dimension_numbers = #tpu.dot_dimension_numbers<[1], [1], [0], [0], [0, 0, 1, 0], [], []>} : vector<8x16xf32>, vector<8x16xf32>, vector<8x8xf32> -> vector<8x8xf32>
    %cst_29 = arith.constant dense<0.000000e+00> : vector<8x8xf32>
    %57 = tpu.matmul %52, %54, %cst_29 {dimension_numbers = #tpu.dot_dimension_numbers<[1], [1], [0], [0], [0, 0, 1, 0], [], []>} : vector<8x8xf32>, vector<8x8xf32>, vector<8x8xf32> -> vector<8x8xf32>
    %58 = arith.addf %56, %57 : vector<8x8xf32>
    %cst_30 = arith.constant 0.204124153 : f32
    %59 = vector.broadcast %cst_30 : f32 to vector<8x8xf32>
    %60 = arith.mulf %58, %59 : vector<8x8xf32>
    %61 = arith.addf %60, %2 : vector<8x8xf32>
    %cst_31 = arith.constant dense<0xFF800000> : vector<8xf32>
    %62 = vector.multi_reduction <maximumf>, %61, %cst_31 [1] : vector<8x8xf32> to vector<8xf32>
    %63 = vector.shape_cast %62 : vector<8xf32> to vector<8x1xf32>
    %64 = vector.broadcast %63 : vector<8x1xf32> to vector<8x8xf32>
    %65 = arith.subf %61, %64 : vector<8x8xf32>
    %66 = math.exp %65 : vector<8x8xf32>
    %cst_32 = arith.constant dense<0.000000e+00> : vector<8xf32>
    %67 = vector.multi_reduction <add>, %66, %cst_32 [1] : vector<8x8xf32> to vector<8xf32>
    %68 = vector.shape_cast %67 : vector<8xf32> to vector<8x1xf32>
    %69 = vector.broadcast %68 : vector<8x1xf32> to vector<8x8xf32>
    %70 = arith.divf %66, %69 : vector<8x8xf32>
    %cst_33 = arith.constant dense<0.000000e+00> : vector<8x16xf32>
    %71 = tpu.matmul %70, %55, %cst_33 {dimension_numbers = #tpu.dot_dimension_numbers<[1], [0], [0], [1], [0, 0, 1, 1], [], []>} : vector<8x8xf32>, vector<8x16xf32>, vector<8x16xf32> -> vector<8x16xf32>
    %72 = vector.extract_strided_slice %43 {offsets = [8, 0], sizes = [8, 16], strides = [1, 1]} : vector<16x16xf32> to vector<8x16xf32>
    %73 = vector.extract_strided_slice %48 {offsets = [8, 0], sizes = [8, 8], strides = [1, 1]} : vector<16x8xf32> to vector<8x8xf32>
    %74 = vector.extract_strided_slice %49 {offsets = [8, 0], sizes = [8, 16], strides = [1, 1]} : vector<16x16xf32> to vector<8x16xf32>
    %75 = vector.extract_strided_slice %42 {offsets = [8, 0], sizes = [8, 8], strides = [1, 1]} : vector<16x8xf32> to vector<8x8xf32>
    %76 = vector.extract_strided_slice %50 {offsets = [8, 0], sizes = [8, 16], strides = [1, 1]} : vector<16x16xf32> to vector<8x16xf32>
    %cst_34 = arith.constant dense<0.000000e+00> : vector<8x8xf32>
    %77 = tpu.matmul %72, %74, %cst_34 {dimension_numbers = #tpu.dot_dimension_numbers<[1], [1], [0], [0], [0, 0, 1, 0], [], []>} : vector<8x16xf32>, vector<8x16xf32>, vector<8x8xf32> -> vector<8x8xf32>
    %cst_35 = arith.constant dense<0.000000e+00> : vector<8x8xf32>
    %78 = tpu.matmul %73, %75, %cst_35 {dimension_numbers = #tpu.dot_dimension_numbers<[1], [1], [0], [0], [0, 0, 1, 0], [], []>} : vector<8x8xf32>, vector<8x8xf32>, vector<8x8xf32> -> vector<8x8xf32>
    %79 = arith.addf %77, %78 : vector<8x8xf32>
    %cst_36 = arith.constant 0.204124153 : f32
    %80 = vector.broadcast %cst_36 : f32 to vector<8x8xf32>
    %81 = arith.mulf %79, %80 : vector<8x8xf32>
    %82 = arith.addf %81, %2 : vector<8x8xf32>
    %cst_37 = arith.constant dense<0xFF800000> : vector<8xf32>
    %83 = vector.multi_reduction <maximumf>, %82, %cst_37 [1] : vector<8x8xf32> to vector<8xf32>
    %84 = vector.shape_cast %83 : vector<8xf32> to vector<8x1xf32>
    %85 = vector.broadcast %84 : vector<8x1xf32> to vector<8x8xf32>
    %86 = arith.subf %82, %85 : vector<8x8xf32>
    %87 = math.exp %86 : vector<8x8xf32>
    %cst_38 = arith.constant dense<0.000000e+00> : vector<8xf32>
    %88 = vector.multi_reduction <add>, %87, %cst_38 [1] : vector<8x8xf32> to vector<8xf32>
    %89 = vector.shape_cast %88 : vector<8xf32> to vector<8x1xf32>
    %90 = vector.broadcast %89 : vector<8x1xf32> to vector<8x8xf32>
    %91 = arith.divf %87, %90 : vector<8x8xf32>
    %cst_39 = arith.constant dense<0.000000e+00> : vector<8x16xf32>
    %92 = tpu.matmul %91, %76, %cst_39 {dimension_numbers = #tpu.dot_dimension_numbers<[1], [0], [0], [1], [0, 0, 1, 1], [], []>} : vector<8x8xf32>, vector<8x16xf32>, vector<8x16xf32> -> vector<8x16xf32>
    %93 = tpu.concatenate %71, %92 in 0 : vector<8x16xf32>, vector<8x16xf32> -> vector<16x16xf32>
    %c0_40 = arith.constant 0 : index
    %c0_41 = arith.constant 0 : index
    %94 = vector.load %arg11[%c0_40, %c0_41] : memref<32x32xf32, #tpu.memory_space<vmem>>, vector<16x32xf32>
    %cst_42 = arith.constant dense<0.000000e+00> : vector<16x32xf32>
    %95 = tpu.matmul %93, %94, %cst_42 {dimension_numbers = #tpu.dot_dimension_numbers<[1], [0], [0], [1], [0, 0, 1, 1], [], []>} : vector<16x16xf32>, vector<16x32xf32>, vector<16x32xf32> -> vector<16x32xf32>
    %96 = vector.extract_strided_slice %21 {offsets = [0, 24], sizes = [16, 16], strides = [1, 1]} : vector<16x48xf32> to vector<16x16xf32>
    %97 = vector.extract_strided_slice %21 {offsets = [0, 40], sizes = [16, 8], strides = [1, 1]} : vector<16x48xf32> to vector<16x8xf32>
    %98 = arith.mulf %97, %3 : vector<16x8xf32>
    %cst_43 = arith.constant dense<0.000000e+00> : vector<16x8xf32>
    %99 = tpu.matmul %97, %5, %cst_43 {dimension_numbers = #tpu.dot_dimension_numbers<[1], [0], [0], [1], [0, 0, 1, 1], [], []>} : vector<16x8xf32>, vector<8x8xf32>, vector<16x8xf32> -> vector<16x8xf32>
    %100 = arith.mulf %99, %4 : vector<16x8xf32>
    %101 = arith.addf %98, %100 : vector<16x8xf32>
    %102 = vector.extract_strided_slice %38 {offsets = [0, 32], sizes = [16, 16], strides = [1, 1]} : vector<16x64xf32> to vector<16x16xf32>
    %103 = vector.extract_strided_slice %38 {offsets = [0, 48], sizes = [16, 16], strides = [1, 1]} : vector<16x64xf32> to vector<16x16xf32>
    %104 = vector.extract_strided_slice %96 {offsets = [0, 0], sizes = [8, 16], strides = [1, 1]} : vector<16x16xf32> to vector<8x16xf32>
    %105 = vector.extract_strided_slice %101 {offsets = [0, 0], sizes = [8, 8], strides = [1, 1]} : vector<16x8xf32> to vector<8x8xf32>
    %106 = vector.extract_strided_slice %102 {offsets = [0, 0], sizes = [8, 16], strides = [1, 1]} : vector<16x16xf32> to vector<8x16xf32>
    %107 = vector.extract_strided_slice %42 {offsets = [0, 0], sizes = [8, 8], strides = [1, 1]} : vector<16x8xf32> to vector<8x8xf32>
    %108 = vector.extract_strided_slice %103 {offsets = [0, 0], sizes = [8, 16], strides = [1, 1]} : vector<16x16xf32> to vector<8x16xf32>
    %cst_44 = arith.constant dense<0.000000e+00> : vector<8x8xf32>
    %109 = tpu.matmul %104, %106, %cst_44 {dimension_numbers = #tpu.dot_dimension_numbers<[1], [1], [0], [0], [0, 0, 1, 0], [], []>} : vector<8x16xf32>, vector<8x16xf32>, vector<8x8xf32> -> vector<8x8xf32>
    %cst_45 = arith.constant dense<0.000000e+00> : vector<8x8xf32>
    %110 = tpu.matmul %105, %107, %cst_45 {dimension_numbers = #tpu.dot_dimension_numbers<[1], [1], [0], [0], [0, 0, 1, 0], [], []>} : vector<8x8xf32>, vector<8x8xf32>, vector<8x8xf32> -> vector<8x8xf32>
    %111 = arith.addf %109, %110 : vector<8x8xf32>
    %cst_46 = arith.constant 0.204124153 : f32
    %112 = vector.broadcast %cst_46 : f32 to vector<8x8xf32>
    %113 = arith.mulf %111, %112 : vector<8x8xf32>
    %114 = arith.addf %113, %2 : vector<8x8xf32>
    %cst_47 = arith.constant dense<0xFF800000> : vector<8xf32>
    %115 = vector.multi_reduction <maximumf>, %114, %cst_47 [1] : vector<8x8xf32> to vector<8xf32>
    %116 = vector.shape_cast %115 : vector<8xf32> to vector<8x1xf32>
    %117 = vector.broadcast %116 : vector<8x1xf32> to vector<8x8xf32>
    %118 = arith.subf %114, %117 : vector<8x8xf32>
    %119 = math.exp %118 : vector<8x8xf32>
    %cst_48 = arith.constant dense<0.000000e+00> : vector<8xf32>
    %120 = vector.multi_reduction <add>, %119, %cst_48 [1] : vector<8x8xf32> to vector<8xf32>
    %121 = vector.shape_cast %120 : vector<8xf32> to vector<8x1xf32>
    %122 = vector.broadcast %121 : vector<8x1xf32> to vector<8x8xf32>
    %123 = arith.divf %119, %122 : vector<8x8xf32>
    %cst_49 = arith.constant dense<0.000000e+00> : vector<8x16xf32>
    %124 = tpu.matmul %123, %108, %cst_49 {dimension_numbers = #tpu.dot_dimension_numbers<[1], [0], [0], [1], [0, 0, 1, 1], [], []>} : vector<8x8xf32>, vector<8x16xf32>, vector<8x16xf32> -> vector<8x16xf32>
    %125 = vector.extract_strided_slice %96 {offsets = [8, 0], sizes = [8, 16], strides = [1, 1]} : vector<16x16xf32> to vector<8x16xf32>
    %126 = vector.extract_strided_slice %101 {offsets = [8, 0], sizes = [8, 8], strides = [1, 1]} : vector<16x8xf32> to vector<8x8xf32>
    %127 = vector.extract_strided_slice %102 {offsets = [8, 0], sizes = [8, 16], strides = [1, 1]} : vector<16x16xf32> to vector<8x16xf32>
    %128 = vector.extract_strided_slice %42 {offsets = [8, 0], sizes = [8, 8], strides = [1, 1]} : vector<16x8xf32> to vector<8x8xf32>
    %129 = vector.extract_strided_slice %103 {offsets = [8, 0], sizes = [8, 16], strides = [1, 1]} : vector<16x16xf32> to vector<8x16xf32>
    %cst_50 = arith.constant dense<0.000000e+00> : vector<8x8xf32>
    %130 = tpu.matmul %125, %127, %cst_50 {dimension_numbers = #tpu.dot_dimension_numbers<[1], [1], [0], [0], [0, 0, 1, 0], [], []>} : vector<8x16xf32>, vector<8x16xf32>, vector<8x8xf32> -> vector<8x8xf32>
    %cst_51 = arith.constant dense<0.000000e+00> : vector<8x8xf32>
    %131 = tpu.matmul %126, %128, %cst_51 {dimension_numbers = #tpu.dot_dimension_numbers<[1], [1], [0], [0], [0, 0, 1, 0], [], []>} : vector<8x8xf32>, vector<8x8xf32>, vector<8x8xf32> -> vector<8x8xf32>
    %132 = arith.addf %130, %131 : vector<8x8xf32>
    %cst_52 = arith.constant 0.204124153 : f32
    %133 = vector.broadcast %cst_52 : f32 to vector<8x8xf32>
    %134 = arith.mulf %132, %133 : vector<8x8xf32>
    %135 = arith.addf %134, %2 : vector<8x8xf32>
    %cst_53 = arith.constant dense<0xFF800000> : vector<8xf32>
    %136 = vector.multi_reduction <maximumf>, %135, %cst_53 [1] : vector<8x8xf32> to vector<8xf32>
    %137 = vector.shape_cast %136 : vector<8xf32> to vector<8x1xf32>
    %138 = vector.broadcast %137 : vector<8x1xf32> to vector<8x8xf32>
    %139 = arith.subf %135, %138 : vector<8x8xf32>
    %140 = math.exp %139 : vector<8x8xf32>
    %cst_54 = arith.constant dense<0.000000e+00> : vector<8xf32>
    %141 = vector.multi_reduction <add>, %140, %cst_54 [1] : vector<8x8xf32> to vector<8xf32>
    %142 = vector.shape_cast %141 : vector<8xf32> to vector<8x1xf32>
    %143 = vector.broadcast %142 : vector<8x1xf32> to vector<8x8xf32>
    %144 = arith.divf %140, %143 : vector<8x8xf32>
    %cst_55 = arith.constant dense<0.000000e+00> : vector<8x16xf32>
    %145 = tpu.matmul %144, %129, %cst_55 {dimension_numbers = #tpu.dot_dimension_numbers<[1], [0], [0], [1], [0, 0, 1, 1], [], []>} : vector<8x8xf32>, vector<8x16xf32>, vector<8x16xf32> -> vector<8x16xf32>
    %146 = tpu.concatenate %124, %145 in 0 : vector<8x16xf32>, vector<8x16xf32> -> vector<16x16xf32>
    %c16 = arith.constant 16 : index
    %c0_56 = arith.constant 0 : index
    %147 = vector.load %arg11[%c16, %c0_56] : memref<32x32xf32, #tpu.memory_space<vmem>>, vector<16x32xf32>
    %cst_57 = arith.constant dense<0.000000e+00> : vector<16x32xf32>
    %148 = tpu.matmul %146, %147, %cst_57 {dimension_numbers = #tpu.dot_dimension_numbers<[1], [0], [0], [1], [0, 0, 1, 1], [], []>} : vector<16x16xf32>, vector<16x32xf32>, vector<16x32xf32> -> vector<16x32xf32>
    %149 = arith.addf %95, %148 : vector<16x32xf32>
    %150 = arith.mulf %149, %149 : vector<16x32xf32>
    %cst_58 = arith.constant dense<0.000000e+00> : vector<16xf32>
    %151 = vector.multi_reduction <add>, %150, %cst_58 [1] : vector<16x32xf32> to vector<16xf32>
    %152 = vector.shape_cast %151 : vector<16xf32> to vector<16x1xf32>
    %cst_59 = arith.constant 1.000000e+00 : f32
    %153 = vector.broadcast %cst_59 : f32 to vector<16x1xf32>
    %154 = arith.addf %153, %152 : vector<16x1xf32>
    %155 = math.sqrt %154 : vector<16x1xf32>
    %cst_60 = arith.constant 0.17407766 : f32
    %156 = vector.broadcast %cst_60 : f32 to vector<16x32xf32>
    %157 = arith.mulf %156, %149 : vector<16x32xf32>
    %158 = arith.addf %1, %157 : vector<16x32xf32>
    %cst_61 = arith.constant 0.17407766 : f32
    %159 = vector.broadcast %cst_61 : f32 to vector<16x1xf32>
    %160 = arith.mulf %159, %155 : vector<16x1xf32>
    %161 = arith.addf %0, %160 : vector<16x1xf32>
    %162 = arith.mulf %158, %158 : vector<16x32xf32>
    %cst_62 = arith.constant dense<0.000000e+00> : vector<16xf32>
    %163 = vector.multi_reduction <add>, %162, %cst_62 [1] : vector<16x32xf32> to vector<16xf32>
    %164 = vector.shape_cast %163 : vector<16xf32> to vector<16x1xf32>
    %165 = arith.mulf %161, %161 : vector<16x1xf32>
    %166 = arith.subf %164, %165 : vector<16x1xf32>
    %cst_63 = arith.constant 0.000000e+00 : f32
    %167 = vector.broadcast %cst_63 : f32 to vector<16x1xf32>
    %168 = arith.subf %167, %166 : vector<16x1xf32>
    %cst_64 = arith.constant 9.99999993E-9 : f32
    %169 = vector.broadcast %cst_64 : f32 to vector<16x1xf32>
    %170 = arith.maximumf %168, %169 : vector<16x1xf32>
    %171 = math.sqrt %170 : vector<16x1xf32>
    %cst_65 = arith.constant 1.000000e+00 : f32
    %172 = vector.broadcast %cst_65 : f32 to vector<16x1xf32>
    %173 = arith.mulf %172, %171 : vector<16x1xf32>
    %174 = vector.broadcast %173 : vector<16x1xf32> to vector<16x32xf32>
    %175 = arith.divf %158, %174 : vector<16x32xf32>
    %176 = arith.divf %161, %173 : vector<16x1xf32>
    %177 = arith.mulf %175, %175 : vector<16x32xf32>
    %cst_66 = arith.constant dense<0.000000e+00> : vector<16xf32>
    %178 = vector.multi_reduction <add>, %177, %cst_66 [1] : vector<16x32xf32> to vector<16xf32>
    %179 = vector.shape_cast %178 : vector<16xf32> to vector<16x1xf32>
    %cst_67 = arith.constant 3.200000e+01 : f32
    %180 = vector.broadcast %cst_67 : f32 to vector<16x1xf32>
    %181 = arith.divf %179, %180 : vector<16x1xf32>
    %cst_68 = arith.constant 9.99999997E-7 : f32
    %182 = vector.broadcast %cst_68 : f32 to vector<16x1xf32>
    %183 = arith.addf %181, %182 : vector<16x1xf32>
    %184 = math.rsqrt %183 : vector<16x1xf32>
    %185 = vector.broadcast %184 : vector<16x1xf32> to vector<16x32xf32>
    %186 = arith.mulf %175, %185 : vector<16x32xf32>
    %c0_69 = arith.constant 0 : index
    %c0_70 = arith.constant 0 : index
    %187 = vector.load %arg12[%c0_69, %c0_70] : memref<1x32xf32, #tpu.memory_space<vmem>>, vector<1x32xf32>
    %188 = vector.broadcast %187 : vector<1x32xf32> to vector<16x32xf32>
    %189 = arith.mulf %186, %188 : vector<16x32xf32>
    %c0_71 = arith.constant 0 : index
    %c0_72 = arith.constant 0 : index
    %190 = vector.load %arg13[%c0_71, %c0_72] : memref<32x128xf32, #tpu.memory_space<vmem>>, vector<32x128xf32>
    %cst_73 = arith.constant dense<0.000000e+00> : vector<16x128xf32>
    %191 = tpu.matmul %189, %190, %cst_73 {dimension_numbers = #tpu.dot_dimension_numbers<[1], [0], [0], [1], [0, 0, 1, 1], [], []>} : vector<16x32xf32>, vector<32x128xf32>, vector<16x128xf32> -> vector<16x128xf32>
    %192 = vector.extract_strided_slice %191 {offsets = [0, 0], sizes = [16, 64], strides = [1, 1]} : vector<16x128xf32> to vector<16x64xf32>
    %193 = vector.extract_strided_slice %191 {offsets = [0, 64], sizes = [16, 64], strides = [1, 1]} : vector<16x128xf32> to vector<16x64xf32>
    %cst_74 = arith.constant 0.000000e+00 : f32
    %194 = vector.broadcast %cst_74 : f32 to vector<16x64xf32>
    %195 = arith.subf %194, %192 : vector<16x64xf32>
    %196 = math.exp %195 : vector<16x64xf32>
    %cst_75 = arith.constant 1.000000e+00 : f32
    %197 = vector.broadcast %cst_75 : f32 to vector<16x64xf32>
    %198 = arith.addf %197, %196 : vector<16x64xf32>
    %cst_76 = arith.constant 1.000000e+00 : f32
    %199 = vector.broadcast %cst_76 : f32 to vector<16x64xf32>
    %200 = arith.divf %199, %198 : vector<16x64xf32>
    %201 = arith.mulf %192, %200 : vector<16x64xf32>
    %202 = arith.mulf %201, %193 : vector<16x64xf32>
    %c0_77 = arith.constant 0 : index
    %c0_78 = arith.constant 0 : index
    %203 = vector.load %arg14[%c0_77, %c0_78] : memref<64x32xf32, #tpu.memory_space<vmem>>, vector<64x32xf32>
    %cst_79 = arith.constant dense<0.000000e+00> : vector<16x32xf32>
    %204 = tpu.matmul %202, %203, %cst_79 {dimension_numbers = #tpu.dot_dimension_numbers<[1], [0], [0], [1], [0, 0, 1, 1], [], []>} : vector<16x64xf32>, vector<64x32xf32>, vector<16x32xf32> -> vector<16x32xf32>
    %205 = arith.mulf %204, %204 : vector<16x32xf32>
    %cst_80 = arith.constant dense<0.000000e+00> : vector<16xf32>
    %206 = vector.multi_reduction <add>, %205, %cst_80 [1] : vector<16x32xf32> to vector<16xf32>
    %207 = vector.shape_cast %206 : vector<16xf32> to vector<16x1xf32>
    %cst_81 = arith.constant 1.000000e+00 : f32
    %208 = vector.broadcast %cst_81 : f32 to vector<16x1xf32>
    %209 = arith.addf %208, %207 : vector<16x1xf32>
    %210 = math.sqrt %209 : vector<16x1xf32>
    %cst_82 = arith.constant 0.17407766 : f32
    %211 = vector.broadcast %cst_82 : f32 to vector<16x32xf32>
    %212 = arith.mulf %211, %204 : vector<16x32xf32>
    %213 = arith.addf %175, %212 : vector<16x32xf32>
    %cst_83 = arith.constant 0.17407766 : f32
    %214 = vector.broadcast %cst_83 : f32 to vector<16x1xf32>
    %215 = arith.mulf %214, %210 : vector<16x1xf32>
    %216 = arith.addf %176, %215 : vector<16x1xf32>
    %217 = arith.mulf %213, %213 : vector<16x32xf32>
    %cst_84 = arith.constant dense<0.000000e+00> : vector<16xf32>
    %218 = vector.multi_reduction <add>, %217, %cst_84 [1] : vector<16x32xf32> to vector<16xf32>
    %219 = vector.shape_cast %218 : vector<16xf32> to vector<16x1xf32>
    %220 = arith.mulf %216, %216 : vector<16x1xf32>
    %221 = arith.subf %219, %220 : vector<16x1xf32>
    %cst_85 = arith.constant 0.000000e+00 : f32
    %222 = vector.broadcast %cst_85 : f32 to vector<16x1xf32>
    %223 = arith.subf %222, %221 : vector<16x1xf32>
    %cst_86 = arith.constant 9.99999993E-9 : f32
    %224 = vector.broadcast %cst_86 : f32 to vector<16x1xf32>
    %225 = arith.maximumf %223, %224 : vector<16x1xf32>
    %226 = math.sqrt %225 : vector<16x1xf32>
    %cst_87 = arith.constant 1.000000e+00 : f32
    %227 = vector.broadcast %cst_87 : f32 to vector<16x1xf32>
    %228 = arith.mulf %227, %226 : vector<16x1xf32>
    %229 = vector.broadcast %228 : vector<16x1xf32> to vector<16x32xf32>
    %230 = arith.divf %213, %229 : vector<16x32xf32>
    %c0_88 = arith.constant 0 : index
    %c0_89 = arith.constant 0 : index
    %231 = vector.load %arg16[%c0_88, %c0_89] : memref<16x32xf32, #tpu.memory_space<vmem>>, vector<16x32xf32>
    tpu.vector_store %arg16[%c0_88, %c0_89], %230 {strides = array<i32>} : memref<16x32xf32, #tpu.memory_space<vmem>>, vector<16x32xf32>,
    %232 = arith.divf %216, %228 : vector<16x1xf32>
    %c0_90 = arith.constant 0 : index
    %c0_91 = arith.constant 0 : index
    %233 = vector.load %arg15[%c0_90, %c0_91] : memref<16x1xf32, #tpu.memory_space<vmem>>, vector<16x1xf32>
    tpu.vector_store %arg15[%c0_90, %c0_91], %232 {strides = array<i32>} : memref<16x1xf32, #tpu.memory_space<vmem>>, vector<16x1xf32>,
    return
  }
  func.func @transform_0(%arg0: i32) -> (i32, i32) {
    %c0_i32 = arith.constant 0 : i32
    %c0_i32_0 = arith.constant 0 : i32
    %c0_i32_1 = arith.constant 0 : i32
    return %c0_i32, %c0_i32_0 : i32, i32
  }
  func.func @transform_1(%arg0: i32) -> (i32, i32) {
    %c0_i32 = arith.constant 0 : i32
    %c0_i32_0 = arith.constant 0 : i32
    %c0_i32_1 = arith.constant 0 : i32
    return %c0_i32, %c0_i32_0 : i32, i32
  }
  func.func @transform_2(%arg0: i32) -> (i32, i32) {
    %c0_i32 = arith.constant 0 : i32
    %c0_i32_0 = arith.constant 0 : i32
    %c0_i32_1 = arith.constant 0 : i32
    return %c0_i32, %c0_i32_0 : i32, i32
  }
  func.func @transform_3(%arg0: i32) -> (i32, i32) {
    %c0_i32 = arith.constant 0 : i32
    %c0_i32_0 = arith.constant 0 : i32
    %c0_i32_1 = arith.constant 0 : i32
    return %c0_i32, %c0_i32_0 : i32, i32
  }
  func.func @transform_4(%arg0: i32) -> (i32, i32) {
    %c0_i32 = arith.constant 0 : i32
    %c0_i32_0 = arith.constant 0 : i32
    %c0_i32_1 = arith.constant 0 : i32
    return %c0_i32, %c0_i32_0 : i32, i32
  }
  func.func @transform_5(%arg0: i32) -> (i32, i32) {
    %c0_i32 = arith.constant 0 : i32
    %c0_i32_0 = arith.constant 0 : i32
    %c0_i32_1 = arith.constant 0 : i32
    return %c0_i32, %c0_i32_0 : i32, i32
  }
  func.func @transform_6(%arg0: i32) -> (i32, i32) {
    %c0_i32 = arith.constant 0 : i32
    %c0_i32_0 = arith.constant 0 : i32
    %c0_i32_1 = arith.constant 0 : i32
    return %c0_i32, %c0_i32_0 : i32, i32
  }
  func.func @transform_7(%arg0: i32) -> (i32, i32) {
    %c0_i32 = arith.constant 0 : i32
    %c0_i32_0 = arith.constant 0 : i32
    %c0_i32_1 = arith.constant 0 : i32
    return %c0_i32, %c0_i32_0 : i32, i32
  }
  func.func @transform_8(%arg0: i32) -> (i32, i32) {
    %c0_i32 = arith.constant 0 : i32
    %c0_i32_0 = arith.constant 0 : i32
    %c0_i32_1 = arith.constant 0 : i32
    return %c0_i32, %c0_i32_0 : i32, i32
  }
  func.func @transform_9(%arg0: i32) -> (i32, i32) {
    %c0_i32 = arith.constant 0 : i32
    %c0_i32_0 = arith.constant 0 : i32
    %c0_i32_1 = arith.constant 0 : i32
    return %c0_i32, %c0_i32_0 : i32, i32
  }
  func.func @transform_10(%arg0: i32) -> (i32, i32) {
    %c0_i32 = arith.constant 0 : i32
    %c0_i32_0 = arith.constant 0 : i32
    %c0_i32_1 = arith.constant 0 : i32
    return %c0_i32, %c0_i32_0 : i32, i32
  }
  func.func @transform_11(%arg0: i32) -> (i32, i32) {
    %c0_i32 = arith.constant 0 : i32
    %c0_i32_0 = arith.constant 0 : i32
    %c0_i32_1 = arith.constant 0 : i32
    return %c0_i32, %c0_i32_0 : i32, i32
  }
  func.func @transform_12(%arg0: i32) -> (i32, i32) {
    %c0_i32 = arith.constant 0 : i32
    %c0_i32_0 = arith.constant 0 : i32
    %c0_i32_1 = arith.constant 0 : i32
    return %c0_i32, %c0_i32_0 : i32, i32
  }
  func.func @transform_13(%arg0: i32) -> (i32, i32) {
    %c0_i32 = arith.constant 0 : i32
    %c0_i32_0 = arith.constant 0 : i32
    %c0_i32_1 = arith.constant 0 : i32
    return %c0_i32, %c0_i32_0 : i32, i32
  }
  func.func @transform_14(%arg0: i32) -> (i32, i32) {
    %c0_i32 = arith.constant 0 : i32
    %c0_i32_0 = arith.constant 0 : i32
    %c0_i32_1 = arith.constant 0 : i32
    return %c0_i32, %c0_i32_0 : i32, i32
  }
  func.func @transform_15(%arg0: i32) -> (i32, i32) {
    %c0_i32 = arith.constant 0 : i32
    %c0_i32_0 = arith.constant 0 : i32
    %c0_i32_1 = arith.constant 0 : i32
    return %c0_i32, %c0_i32_0 : i32, i32
  }
}

</mosaic_0001>

<llo_original>
// kernel: _lambda_.1
$region0: #{_lambda_.1}
  #allocation0 [shape = 'u32[]', space=smem, size = 0x4, offset = 0x4, fixed_abs, tag = 'smem constant byte address 0x4 - core index']
  #allocation1 [shape = 'u32[144,128]{1,0:T(1,128)}', space=vmem, size = 0x12000, scoped, tag = 'internal scratch']
  %s0 = inlined_call_operand.vmem [shape: f32[16,1], index: 0, kind: input, shape index: {}]
  %s1 = inlined_call_operand.vmem [shape: f32[16,32], index: 1, kind: input, shape index: {}]
  %s2 = inlined_call_operand.hbm [shape: f32[8,8], index: 2, kind: input, shape index: {}]
  %s3 = inlined_call_operand.vmem [shape: f32[16,8], index: 3, kind: input, shape index: {}]
  %s4 = inlined_call_operand.vmem [shape: f32[16,8], index: 4, kind: input, shape index: {}]
  %s5 = inlined_call_operand.hbm [shape: f32[8,8], index: 5, kind: input, shape index: {}]
  %s6 = inlined_call_operand.vmem [shape: f32[1,32], index: 6, kind: input, shape index: {}, may-alias: {6,11}]
  %s7 = inlined_call_operand.vmem [shape: f32[32,72], index: 7, kind: input, shape index: {}]
  %s8 = inlined_call_operand.vmem [shape: f32[1,16], index: 8, kind: input, shape index: {}]
  %s9 = inlined_call_operand.vmem [shape: f32[16,64], index: 9, kind: input, shape index: {}]
  %s10 = inlined_call_operand.vmem [shape: f32[32,32], index: 10, kind: input, shape index: {}]
  %s11 = inlined_call_operand.vmem [shape: f32[1,32], index: 11, kind: input, shape index: {}, may-alias: {6,11}]
  %s12 = inlined_call_operand.vmem [shape: f32[32,128], index: 12, kind: input, shape index: {}]
  %s13 = inlined_call_operand.vmem [shape: f32[64,32], index: 13, kind: input, shape index: {}]
  %s14 = inlined_call_operand.vmem [shape: f32[16,1], index: 14, kind: output, shape index: {0}]
  %s15 = inlined_call_operand.vmem [shape: f32[16,32], index: 15, kind: output, shape index: {1}]
  %16 = xla_tuple %s14, %s15
  %s17 = sld [smem:[#allocation0]]
  $region82: #{_lambda_.1} parent=0
    _
  %s19 = ssub.s32 1, %s17
  %s20 = scalar_select 0, %s19, %s17
  $region1: #{_lambda_.1} parent=0
    #allocation2 [shape = 'u8[4096]{0}', space=vmem, size = 0x1000, scoped, tag = 'input window, operand 2, single buffered']
    #allocation3 [shape = 's32[1]{0}', space=sflag, size = 0x4, scoped, tag = 'scoped memory for _lambda_.1']
    #allocation4 [shape = 'u8[4096]{0}', space=vmem, size = 0x1000, scoped, tag = 'input window, operand 5, single buffered']
    #allocation5 [shape = 's32[1]{0}', space=sflag, size = 0x4, scoped, tag = 'scoped memory for _lambda_.1']
    %21 = vsyncpa [#allocation3], 0
    %22 = vsyncpa [#allocation5], 0
    // Predicated region
    $region2: #{_lambda_.1} parent=1 // pred_check
      _
    $region3: #{_lambda_.1} parent=1 // pred_check_branch
      %24 = sbr.rel (0) target = $region5
    $region4: #{_lambda_.1} parent=1 // pred_region
      _
    $region5: #{_lambda_.1} parent=1 // pred_fallthru
      _
    // Predicated region
    $region6: #{_lambda_.1} parent=1 // pred_check
      _
    $region7: #{_lambda_.1} parent=1 // pred_check_branch
      %26 = sbr.rel (0) target = $region9
    $region8: #{_lambda_.1} parent=1 // pred_region
      _
    $region9: #{_lambda_.1} parent=1 // pred_fallthru
      _
    // Predicated region
    $region10: #{_lambda_.1} parent=1 // pred_check
      _
    $region11: #{_lambda_.1} parent=1 // pred_check_branch
      %28 = sbr.rel (0) target = $region13
    $region12: #{_lambda_.1} parent=1 // pred_region
      %s30 = ssub.s32 128, 128
      %31 = vsyncadd [#allocation3], %s30
      %s33 = sshll.u32 [#allocation2], 4
      %s34 = int_to_ptr.vmem [resolvable:$true] %s33
      %36 = dma.hbm_to_vmem [thread:$0]  %s2, 128, %s34, [#allocation3]
    $region13: #{_lambda_.1} parent=1 // pred_fallthru
      _
    // Predicated region
    $region14: #{_lambda_.1} parent=1 // pred_check
      _
    $region15: #{_lambda_.1} parent=1 // pred_check_branch
      %38 = sbr.rel (0) target = $region17
    $region16: #{_lambda_.1} parent=1 // pred_region
      _
    $region17: #{_lambda_.1} parent=1 // pred_fallthru
      _
    // Predicated region
    $region18: #{_lambda_.1} parent=1 // pred_check
      _
    $region19: #{_lambda_.1} parent=1 // pred_check_branch
      %40 = sbr.rel (0) target = $region21
    $region20: #{_lambda_.1} parent=1 // pred_region
      _
    $region21: #{_lambda_.1} parent=1 // pred_fallthru
      _
    // Predicated region
    $region22: #{_lambda_.1} parent=1 // pred_check
      _
    $region23: #{_lambda_.1} parent=1 // pred_check_branch
      %42 = sbr.rel (0) target = $region25
    $region24: #{_lambda_.1} parent=1 // pred_region
      %s44 = ssub.s32 128, 128
      %45 = vsyncadd [#allocation5], %s44
      %s47 = sshll.u32 [#allocation4], 4
      %s48 = int_to_ptr.vmem [resolvable:$true] %s47
      %50 = dma.hbm_to_vmem [thread:$0]  %s5, 128, %s48, [#allocation5]
    $region25: #{_lambda_.1} parent=1 // pred_fallthru
      _
    // Predicated region
    $region26: #{_lambda_.1} parent=1 // pred_check
      _
    $region27: #{_lambda_.1} parent=1 // pred_check_branch
      %52 = sbr.rel (0) target = $region29
    $region28: #{_lambda_.1} parent=1 // pred_region
      _
    $region29: #{_lambda_.1} parent=1 // pred_fallthru
      _
    // Predicated region
    $region30: #{_lambda_.1} parent=1 // pred_check
      _
    $region31: #{_lambda_.1} parent=1 // pred_check_branch
      %54 = sbr.rel (0) target = $region33
    $region32: #{_lambda_.1} parent=1 // pred_region
      _
    $region33: #{_lambda_.1} parent=1 // pred_fallthru
      _
    // Predicated region
    $region34: #{_lambda_.1} parent=1 // pred_check
      _
    $region35: #{_lambda_.1} parent=1 // pred_check_branch
      %56 = sbr.rel (0) target = $region37
    $region36: #{_lambda_.1} parent=1 // pred_region
      _
    $region37: #{_lambda_.1} parent=1 // pred_fallthru
      _
    // Predicated region
    $region38: #{_lambda_.1} parent=1 // pred_check
      _
    $region39: #{_lambda_.1} parent=1 // pred_check_branch
      %58 = sbr.rel (0) target = $region41
    $region40: #{_lambda_.1} parent=1 // pred_region
      _
    $region41: #{_lambda_.1} parent=1 // pred_fallthru
      _
    // Predicated region
    $region42: #{_lambda_.1} parent=1 // pred_check
      _
    $region43: #{_lambda_.1} parent=1 // pred_check_branch
      %60 = sbr.rel (0) target = $region45
    $region44: #{_lambda_.1} parent=1 // pred_region
      _
    $region45: #{_lambda_.1} parent=1 // pred_fallthru
      _
    // Predicated region
    $region46: #{_lambda_.1} parent=1 // pred_check
      _
    $region47: #{_lambda_.1} parent=1 // pred_check_branch
      %62 = sbr.rel (0) target = $region49
    $region48: #{_lambda_.1} parent=1 // pred_region
      _
    $region49: #{_lambda_.1} parent=1 // pred_fallthru
      _
    // Predicated region
    $region50: #{_lambda_.1} parent=1 // pred_check
      _
    $region51: #{_lambda_.1} parent=1 // pred_check_branch
      %64 = sbr.rel (0) target = $region53
    $region52: #{_lambda_.1} parent=1 // pred_region
      _
    $region53: #{_lambda_.1} parent=1 // pred_fallthru
      _
    // Predicated region
    $region54: #{_lambda_.1} parent=1 // pred_check
      _
    $region55: #{_lambda_.1} parent=1 // pred_check_branch
      %66 = sbr.rel (0) target = $region57
    $region56: #{_lambda_.1} parent=1 // pred_region
      _
    $region57: #{_lambda_.1} parent=1 // pred_fallthru
      _
    // Predicated region
    $region58: #{_lambda_.1} parent=1 // pred_check
      _
    $region59: #{_lambda_.1} parent=1 // pred_check_branch
      %68 = sbr.rel (0) target = $region61
    $region60: #{_lambda_.1} parent=1 // pred_region
      %69 = dma.done [#allocation3], 128
    $region61: #{_lambda_.1} parent=1 // pred_fallthru
      _
    // Predicated region
    $region62: #{_lambda_.1} parent=1 // pred_check
      _
    $region63: #{_lambda_.1} parent=1 // pred_check_branch
      %71 = sbr.rel (0) target = $region65
    $region64: #{_lambda_.1} parent=1 // pred_region
      %72 = dma.done [#allocation5], 128
    $region65: #{_lambda_.1} parent=1 // pred_fallthru
      _
    %v73 = vld [vmem:[%s0] sm:$0xff]
    %v74 = vld [vmem:[%s0 + $0x8] sm:$0xff]
    %v75 = vld [vmem:[%s1] sm:$0xff]
    %v76 = vld [vmem:[%s1 + $0x8] sm:$0xff]
    %v77 = vld [vmem:[#allocation2] sm:$0xff]
    %v78 = vld [vmem:[%s3] sm:$0xff]
    %v79 = vld [vmem:[%s3 + $0x8] sm:$0xff]
    %v80 = vld [vmem:[%s4] sm:$0xff]
    %v81 = vld [vmem:[%s4 + $0x8] sm:$0xff]
    %v82 = vld [vmem:[#allocation4] sm:$0xff]
    %v83 = vmul.f32 %v75, %v75
    %v84 = vmul.f32 %v76, %v76
    %vm85 = vcmask 261120
    %v86 = vsel %vm85, %v83, 0.0
    %87 = vadd.xlane.f32.xlu0 %v86
    %v88 = vpop.xlane.xlu0 %87
    %v89 = vsel %vm85, %v84, 0.0
    %90 = vadd.xlane.f32.xlu0 %v89
    %v91 = vpop.xlane.xlu0 %90
    %v92 = vrcp.pop 32.0
    %v93 = vmul.f32 %v88, %v92
    %v94 = vmul.f32 %v91, %v92
    %v95 = vadd.f32 %v93, 1e-06
    %v96 = vadd.f32 %v94, 1e-06
    %v97 = vrsqrt.pop %v95
    %v98 = vrsqrt.pop %v96
    %v99 = vmul.f32 %v75, %v97
    %v100 = vmul.f32 %v76, %v98
    %v101 = vld [vmem:[%s6] sm:$0x1]
    %v103 = vlaneseq
    %v104 = vshrl.u32 %v103, 7
    %v105 = vsub.s32 0, %v104
    %v106 = vrot.slane %v101, %v105
    %v108 = vmul.f32 %v99, %v106
    %v109 = vmul.f32 %v100, %v106
    %v110 = vld [vmem:[%s7] sm:$0xff]
    %v111 = vld [vmem:[%s7 + $0x8] sm:$0xff]
    %v112 = vld [vmem:[%s7 + $0x10] sm:$0xff]
    %v113 = vld [vmem:[%s7 + $0x18] sm:$0xff]
    %v115 = vsel %vm85, %v108, 0
    %v118 = vsel %vm85, %v109, 0
    %120 = vmatprep.subr.mxu0 0.0
    %121 = vmatpush1.msra.mxu0 %v110
    %122 = vmatprep.subr.mxu0 0.0
    %123 = vmatpush1.msra.mxu0 %v111
    %124 = vmatprep.subr.mxu0 0.0
    %125 = vmatpush1.msra.mxu0 %v112
    %126 = vmatprep.subr.mxu0 0.0
    %127 = vmatpush1.msra.mxu0 %v113
    %128 = vmatprep.subr.mxu0 0.0
    %129 = vmatpush1.msra.mxu0 0.0
    %130 = vmatprep.subr.mxu0 0.0
    %131 = vmatpush1.msra.mxu0 0.0
    %132 = vmatprep.subr.mxu0 0.0
    %133 = vmatpush1.msra.mxu0 0.0
    %134 = vmatprep.subr.mxu0 0.0
    %135 = vmatpush1.msra.mxu0 0.0
    %136 = vmatprep.subr.mxu0 0.0
    %137 = vmatpush1.msra.mxu0 0.0
    %138 = vmatprep.subr.mxu0 0.0
    %139 = vmatpush1.msra.mxu0 0.0
    %140 = vmatprep.subr.mxu0 0.0
    %141 = vmatpush1.msra.mxu0 0.0
    %142 = vmatprep.subr.mxu0 0.0
    %143 = vmatpush1.msra.mxu0 0.0
    %144 = vmatprep.subr.mxu0 0.0
    %145 = vmatpush1.msra.mxu0 0.0
    %146 = vmatprep.subr.mxu0 0.0
    %147 = vmatpush1.msra.mxu0 0.0
    %148 = vmatprep.subr.mxu0 0.0
    %149 = vmatpush1.msra.mxu0 0.0
    %150 = vmatprep.subr.mxu0 0.0
    %151 = vmatpush1.msra.mxu0 0.0
    %152 = vmatprep.subr.mxu0 0.0
    %153 = vmatpush1.msra.mxu0 0.0
    %154 = vmatprep.subr.mxu0 0.0
    %155 = vmatpush1.msra.mxu0 0.0
    %156 = vmatprep.subr.mxu0 0.0
    %157 = vmatpush1.msra.mxu0 0.0
    %158 = vmatprep.subr.mxu0 0.0
    %159 = vmatpush1.msra.mxu0 0.0
    %160 = vmatprep.subr.mxu0 0.0
    %161 = vmatpush1.msra.mxu0 0.0
    %162 = vmatprep.subr.mxu0 0.0
    %163 = vmatpush1.msra.mxu0 0.0
    %164 = vmatprep.subr.mxu0 0.0
    %165 = vmatpush1.msra.mxu0 0.0
    %166 = vmatprep.subr.mxu0 0.0
    %167 = vmatpush1.msra.mxu0 0.0
    %168 = vmatprep.subr.mxu0 0.0
    %169 = vmatpush1.msra.mxu0 0.0
    %170 = vmatprep.subr.mxu0 0.0
    %171 = vmatpush1.msra.mxu0 0.0
    %172 = vmatprep.subr.mxu0 0.0
    %173 = vmatpush1.msra.mxu0 0.0
    %174 = vmatprep.subr.mxu0 0.0
    %175 = vmatpush1.msra.mxu0 0.0
    %176 = vmatprep.subr.mxu0 0.0
    %177 = vmatpush1.msra.mxu0 0.0
    %178 = vmatprep.subr.mxu0 0.0
    %179 = vmatpush1.msra.mxu0 0.0
    %180 = vmatprep.subr.mxu0 0.0
    %181 = vmatpush1.msra.mxu0 0.0
    %182 = vmatprep.subr.mxu0 0.0
    %183 = vmatpush1.msra.mxu0 0.0
    %184 = vmatprep.mubr.f32.mxu0 0.0
    %185 = vmatmul.mubr.f32.gmra.mrb[0].mxu0 %v115
    %v186 = vpop.f32.mrb[0].mxu0
    %v187 = vadd.f32 0.0, %v186
    %v188 = vpop.f32.mrb[0].mxu0
    %189 = vmatprep.mubr.f32.mxu0 0.0
    %190 = vmatmul.mubr.f32.gmra.mrb[0].mxu0 %v118
    %v191 = vpop.f32.mrb[0].mxu0
    %v192 = vadd.f32 0.0, %v191
    %v193 = vpop.f32.mrb[0].mxu0
    %194 = vdwg.mxu0
    %v195 = vmul.f32 %v187, %v187
    %v196 = vmul.f32 %v192, %v192
    %199 = vrot.lane.b32.xlu0 %v195, 80
    %v200 = vpop.permute.xlu0 %199
    %201 = vrot.lane.b32.xlu0 %v196, 80
    %v202 = vpop.permute.xlu0 %201
    %vm205 = vcmask 130048
    %v206 = vsel %vm205, %v200, 0.0
    %207 = vadd.xlane.f32.xlu0 %v206
    %v208 = vpop.xlane.xlu0 %207
    %v209 = vsel %vm205, %v202, 0.0
    %210 = vadd.xlane.f32.xlu0 %v209
    %v211 = vpop.xlane.xlu0 %210
    %v212 = vrcp.pop 16.0
    %v213 = vmul.f32 %v208, %v212
    %v214 = vmul.f32 %v211, %v212
    %v215 = vadd.f32 %v213, 1e-06
    %v216 = vadd.f32 %v214, 1e-06
    %v217 = vrsqrt.pop %v215
    %v218 = vrsqrt.pop %v216
    %v219 = vmul.f32 %v187, %v217
    %v220 = vmul.f32 %v192, %v218
    %v221 = vld [vmem:[%s8] sm:$0x1]
    %v223 = vlaneseq
    %v224 = vshrl.u32 %v223, 7
    %v225 = vsub.s32 0, %v224
    %v226 = vrot.slane %v221, %v225
    %227 = vrot.lane.b32.xlu0 %v226, 48
    %v228 = vpop.permute.xlu0 %227
    %v230 = vmul.f32 %v219, %v228
    %v231 = vmul.f32 %v220, %v228
    %v232 = vld [vmem:[%s9] sm:$0xff]
    %v233 = vld [vmem:[%s9 + $0x8] sm:$0xff]
    %236 = vrot.lane.b32.xlu0 %v230, 80
    %v237 = vpop.permute.xlu0 %236
    %238 = vrot.lane.b32.xlu0 %v231, 80
    %v239 = vpop.permute.xlu0 %238
    %v240 = vsel %vm205, %v237, 0
    %v242 = vsel %vm205, %v239, 0
    %244 = vmatprep.subr.mxu0 0.0
    %245 = vmatpush1.msra.mxu0 %v232
    %246 = vmatprep.subr.mxu0 0.0
    %247 = vmatpush1.msra.mxu0 %v233
    %248 = vmatprep.subr.mxu0 0.0
    %249 = vmatpush1.msra.mxu0 0.0
    %250 = vmatprep.subr.mxu0 0.0
    %251 = vmatpush1.msra.mxu0 0.0
    %252 = vmatprep.subr.mxu0 0.0
    %253 = vmatpush1.msra.mxu0 0.0
    %254 = vmatprep.subr.mxu0 0.0
    %255 = vmatpush1.msra.mxu0 0.0
    %256 = vmatprep.subr.mxu0 0.0
    %257 = vmatpush1.msra.mxu0 0.0
    %258 = vmatprep.subr.mxu0 0.0
    %259 = vmatpush1.msra.mxu0 0.0
    %260 = vmatprep.subr.mxu0 0.0
    %261 = vmatpush1.msra.mxu0 0.0
    %262 = vmatprep.subr.mxu0 0.0
    %263 = vmatpush1.msra.mxu0 0.0
    %264 = vmatprep.subr.mxu0 0.0
    %265 = vmatpush1.msra.mxu0 0.0
    %266 = vmatprep.subr.mxu0 0.0
    %267 = vmatpush1.msra.mxu0 0.0
    %268 = vmatprep.subr.mxu0 0.0
    %269 = vmatpush1.msra.mxu0 0.0
    %270 = vmatprep.subr.mxu0 0.0
    %271 = vmatpush1.msra.mxu0 0.0
    %272 = vmatprep.subr.mxu0 0.0
    %273 = vmatpush1.msra.mxu0 0.0
    %274 = vmatprep.subr.mxu0 0.0
    %275 = vmatpush1.msra.mxu0 0.0
    %276 = vmatprep.subr.mxu0 0.0
    %277 = vmatpush1.msra.mxu0 0.0
    %278 = vmatprep.subr.mxu0 0.0
    %279 = vmatpush1.msra.mxu0 0.0
    %280 = vmatprep.subr.mxu0 0.0
    %281 = vmatpush1.msra.mxu0 0.0
    %282 = vmatprep.subr.mxu0 0.0
    %283 = vmatpush1.msra.mxu0 0.0
    %284 = vmatprep.subr.mxu0 0.0
    %285 = vmatpush1.msra.mxu0 0.0
    %286 = vmatprep.subr.mxu0 0.0
    %287 = vmatpush1.msra.mxu0 0.0
    %288 = vmatprep.subr.mxu0 0.0
    %289 = vmatpush1.msra.mxu0 0.0
    %290 = vmatprep.subr.mxu0 0.0
    %291 = vmatpush1.msra.mxu0 0.0
    %292 = vmatprep.subr.mxu0 0.0
    %293 = vmatpush1.msra.mxu0 0.0
    %294 = vmatprep.subr.mxu0 0.0
    %295 = vmatpush1.msra.mxu0 0.0
    %296 = vmatprep.subr.mxu0 0.0
    %297 = vmatpush1.msra.mxu0 0.0
    %298 = vmatprep.subr.mxu0 0.0
    %299 = vmatpush1.msra.mxu0 0.0
    %300 = vmatprep.subr.mxu0 0.0
    %301 = vmatpush1.msra.mxu0 0.0
    %302 = vmatprep.subr.mxu0 0.0
    %303 = vmatpush1.msra.mxu0 0.0
    %304 = vmatprep.subr.mxu0 0.0
    %305 = vmatpush1.msra.mxu0 0.0
    %306 = vmatprep.subr.mxu0 0.0
    %307 = vmatpush1.msra.mxu0 0.0
    %308 = vmatprep.mubr.f32.mxu0 0.0
    %309 = vmatmul.mubr.f32.gmra.mrb[0].mxu0 %v240
    %v310 = vpop.f32.mrb[0].mxu0
    %v311 = vadd.f32 0.0, %v310
    %v312 = vpop.f32.mrb[0].mxu0
    %313 = vmatprep.mubr.f32.mxu0 0.0
    %314 = vmatmul.mubr.f32.gmra.mrb[0].mxu0 %v242
    %v315 = vpop.f32.mrb[0].mxu0
    %v316 = vadd.f32 0.0, %v315
    %v317 = vpop.f32.mrb[0].mxu0
    %318 = vdwg.mxu0
    %321 = vrot.lane.b32.xlu0 %v78, 64
    %v322 = vpop.permute.xlu0 %321
    %323 = vrot.lane.b32.xlu0 %v79, 64
    %v324 = vpop.permute.xlu0 %323
    %v327 = vmul.f32 %v187, %v322
    %v328 = vmul.f32 %v192, %v324
    %331 = vrot.lane.b32.xlu0 %v187, 64
    %v332 = vpop.permute.xlu0 %331
    %333 = vrot.lane.b32.xlu0 %v192, 64
    %v334 = vpop.permute.xlu0 %333
    %vm335 = vcmask 64512
    %v336 = vsel %vm335, %v332, 0
    %v338 = vsel %vm335, %v334, 0
    %340 = vmatprep.subr.mxu0 0.0
    %341 = vmatpush1.msra.mxu0 %v82
    %342 = vmatprep.subr.mxu0 0.0
    %343 = vmatpush1.msra.mxu0 0.0
    %344 = vmatprep.subr.mxu0 0.0
    %345 = vmatpush1.msra.mxu0 0.0
    %346 = vmatprep.subr.mxu0 0.0
    %347 = vmatpush1.msra.mxu0 0.0
    %348 = vmatprep.subr.mxu0 0.0
    %349 = vmatpush1.msra.mxu0 0.0
    %350 = vmatprep.subr.mxu0 0.0
    %351 = vmatpush1.msra.mxu0 0.0
    %352 = vmatprep.subr.mxu0 0.0
    %353 = vmatpush1.msra.mxu0 0.0
    %354 = vmatprep.subr.mxu0 0.0
    %355 = vmatpush1.msra.mxu0 0.0
    %356 = vmatprep.subr.mxu0 0.0
    %357 = vmatpush1.msra.mxu0 0.0
    %358 = vmatprep.subr.mxu0 0.0
    %359 = vmatpush1.msra.mxu0 0.0
    %360 = vmatprep.subr.mxu0 0.0
    %361 = vmatpush1.msra.mxu0 0.0
    %362 = vmatprep.subr.mxu0 0.0
    %363 = vmatpush1.msra.mxu0 0.0
    %364 = vmatprep.subr.mxu0 0.0
    %365 = vmatpush1.msra.mxu0 0.0
    %366 = vmatprep.subr.mxu0 0.0
    %367 = vmatpush1.msra.mxu0 0.0
    %368 = vmatprep.subr.mxu0 0.0
    %369 = vmatpush1.msra.mxu0 0.0
    %370 = vmatprep.subr.mxu0 0.0
    %371 = vmatpush1.msra.mxu0 0.0
    %372 = vmatprep.subr.mxu0 0.0
    %373 = vmatpush1.msra.mxu0 0.0
    %374 = vmatprep.subr.mxu0 0.0
    %375 = vmatpush1.msra.mxu0 0.0
    %376 = vmatprep.subr.mxu0 0.0
    %377 = vmatpush1.msra.mxu0 0.0
    %378 = vmatprep.subr.mxu0 0.0
    %379 = vmatpush1.msra.mxu0 0.0
    %380 = vmatprep.subr.mxu0 0.0
    %381 = vmatpush1.msra.mxu0 0.0
    %382 = vmatprep.subr.mxu0 0.0
    %383 = vmatpush1.msra.mxu0 0.0
    %384 = vmatprep.subr.mxu0 0.0
    %385 = vmatpush1.msra.mxu0 0.0
    %386 = vmatprep.subr.mxu0 0.0
    %387 = vmatpush1.msra.mxu0 0.0
    %388 = vmatprep.subr.mxu0 0.0
    %389 = vmatpush1.msra.mxu0 0.0
    %390 = vmatprep.subr.mxu0 0.0
    %391 = vmatpush1.msra.mxu0 0.0
    %392 = vmatprep.subr.mxu0 0.0
    %393 = vmatpush1.msra.mxu0 0.0
    %394 = vmatprep.subr.mxu0 0.0
    %395 = vmatpush1.msra.mxu0 0.0
    %396 = vmatprep.subr.mxu0 0.0
    %397 = vmatpush1.msra.mxu0 0.0
    %398 = vmatprep.subr.mxu0 0.0
    %399 = vmatpush1.msra.mxu0 0.0
    %400 = vmatprep.subr.mxu0 0.0
    %401 = vmatpush1.msra.mxu0 0.0
    %402 = vmatprep.subr.mxu0 0.0
    %403 = vmatpush1.msra.mxu0 0.0
    %404 = vmatprep.mubr.f32.mxu0 0.0
    %405 = vmatmul.mubr.f32.gmra.mrb[0].mxu0 %v336
    %v406 = vpop.f32.mrb[0].mxu0
    %v407 = vadd.f32 0.0, %v406
    %v408 = vpop.f32.mrb[0].mxu0
    %409 = vmatprep.mubr.f32.mxu0 0.0
    %410 = vmatmul.mubr.f32.gmra.mrb[0].mxu0 %v338
    %v411 = vpop.f32.mrb[0].mxu0
    %v412 = vadd.f32 0.0, %v411
    %v413 = vpop.f32.mrb[0].mxu0
    %414 = vdwg.mxu0
    %v415 = vmul.f32 %v407, %v80
    %v416 = vmul.f32 %v412, %v81
    %419 = vrot.lane.b32.xlu0 %v415, 64
    %v420 = vpop.permute.xlu0 %419
    %421 = vrot.lane.b32.xlu0 %v416, 64
    %v422 = vpop.permute.xlu0 %421
    %v425 = vadd.f32 %v327, %v420
    %v426 = vadd.f32 %v328, %v422
    %427 = vrot.lane.b32.xlu0 %v78, 16
    %v428 = vpop.permute.xlu0 %427
    %429 = vrot.lane.b32.xlu0 %v79, 16
    %v430 = vpop.permute.xlu0 %429
    %v433 = vmul.f32 %v187, %v428
    %v434 = vmul.f32 %v192, %v430
    %435 = vrot.lane.b32.xlu0 %v187, 112
    %v436 = vpop.permute.xlu0 %435
    %437 = vrot.lane.b32.xlu0 %v192, 112
    %v438 = vpop.permute.xlu0 %437
    %v439 = vsel %vm335, %v436, 0
    %v441 = vsel %vm335, %v438, 0
    %443 = vmatprep.subr.mxu0 0.0
    %444 = vmatpush1.msra.mxu0 %v82
    %445 = vmatprep.subr.mxu0 0.0
    %446 = vmatpush1.msra.mxu0 0.0
    %447 = vmatprep.subr.mxu0 0.0
    %448 = vmatpush1.msra.mxu0 0.0
    %449 = vmatprep.subr.mxu0 0.0
    %450 = vmatpush1.msra.mxu0 0.0
    %451 = vmatprep.subr.mxu0 0.0
    %452 = vmatpush1.msra.mxu0 0.0
    %453 = vmatprep.subr.mxu0 0.0
    %454 = vmatpush1.msra.mxu0 0.0
    %455 = vmatprep.subr.mxu0 0.0
    %456 = vmatpush1.msra.mxu0 0.0
    %457 = vmatprep.subr.mxu0 0.0
    %458 = vmatpush1.msra.mxu0 0.0
    %459 = vmatprep.subr.mxu0 0.0
    %460 = vmatpush1.msra.mxu0 0.0
    %461 = vmatprep.subr.mxu0 0.0
    %462 = vmatpush1.msra.mxu0 0.0
    %463 = vmatprep.subr.mxu0 0.0
    %464 = vmatpush1.msra.mxu0 0.0
    %465 = vmatprep.subr.mxu0 0.0
    %466 = vmatpush1.msra.mxu0 0.0
    %467 = vmatprep.subr.mxu0 0.0
    %468 = vmatpush1.msra.mxu0 0.0
    %469 = vmatprep.subr.mxu0 0.0
    %470 = vmatpush1.msra.mxu0 0.0
    %471 = vmatprep.subr.mxu0 0.0
    %472 = vmatpush1.msra.mxu0 0.0
    %473 = vmatprep.subr.mxu0 0.0
    %474 = vmatpush1.msra.mxu0 0.0
    %475 = vmatprep.subr.mxu0 0.0
    %476 = vmatpush1.msra.mxu0 0.0
    %477 = vmatprep.subr.mxu0 0.0
    %478 = vmatpush1.msra.mxu0 0.0
    %479 = vmatprep.subr.mxu0 0.0
    %480 = vmatpush1.msra.mxu0 0.0
    %481 = vmatprep.subr.mxu0 0.0
    %482 = vmatpush1.msra.mxu0 0.0
    %483 = vmatprep.subr.mxu0 0.0
    %484 = vmatpush1.msra.mxu0 0.0
    %485 = vmatprep.subr.mxu0 0.0
    %486 = vmatpush1.msra.mxu0 0.0
    %487 = vmatprep.subr.mxu0 0.0
    %488 = vmatpush1.msra.mxu0 0.0
    %489 = vmatprep.subr.mxu0 0.0
    %490 = vmatpush1.msra.mxu0 0.0
    %491 = vmatprep.subr.mxu0 0.0
    %492 = vmatpush1.msra.mxu0 0.0
    %493 = vmatprep.subr.mxu0 0.0
    %494 = vmatpush1.msra.mxu0 0.0
    %495 = vmatprep.subr.mxu0 0.0
    %496 = vmatpush1.msra.mxu0 0.0
    %497 = vmatprep.subr.mxu0 0.0
    %498 = vmatpush1.msra.mxu0 0.0
    %499 = vmatprep.subr.mxu0 0.0
    %500 = vmatpush1.msra.mxu0 0.0
    %501 = vmatprep.subr.mxu0 0.0
    %502 = vmatpush1.msra.mxu0 0.0
    %503 = vmatprep.subr.mxu0 0.0
    %504 = vmatpush1.msra.mxu0 0.0
    %505 = vmatprep.subr.mxu0 0.0
    %506 = vmatpush1.msra.mxu0 0.0
    %507 = vmatprep.mubr.f32.mxu0 0.0
    %508 = vmatmul.mubr.f32.gmra.mrb[0].mxu0 %v439
    %v509 = vpop.f32.mrb[0].mxu0
    %v510 = vadd.f32 0.0, %v509
    %v511 = vpop.f32.mrb[0].mxu0
    %512 = vmatprep.mubr.f32.mxu0 0.0
    %513 = vmatmul.mubr.f32.gmra.mrb[0].mxu0 %v441
    %v514 = vpop.f32.mrb[0].mxu0
    %v515 = vadd.f32 0.0, %v514
    %v516 = vpop.f32.mrb[0].mxu0
    %517 = vdwg.mxu0
    %v518 = vmul.f32 %v510, %v80
    %v519 = vmul.f32 %v515, %v81
    %522 = vrot.lane.b32.xlu0 %v518, 16
    %v523 = vpop.permute.xlu0 %522
    %524 = vrot.lane.b32.xlu0 %v519, 16
    %v525 = vpop.permute.xlu0 %524
    %v528 = vadd.f32 %v433, %v523
    %v529 = vadd.f32 %v434, %v525
    %531 = vrot.lane.b32.xlu0 %v528, 112
    %v532 = vpop.permute.xlu0 %531
    %534 = vrot.lane.b32.xlu0 %v425, 64
    %v535 = vpop.permute.xlu0 %534
    %v536 = vsel %vm335, %v532, 0
    %v538 = vsel %vm335, %v535, 0
    %540 = vmatprep.subr.mxu0 0.0
    %541 = vmatpush1.xpose.msra.mxu0 %v538
    %542 = vmatprep.subr.mxu0 0.0
    %543 = vmatpush1.xpose.msra.mxu0 0.0
    %544 = vmatprep.subr.mxu0 0.0
    %545 = vmatpush1.xpose.msra.mxu0 0.0
    %546 = vmatprep.subr.mxu0 0.0
    %547 = vmatpush1.xpose.msra.mxu0 0.0
    %548 = vmatprep.subr.mxu0 0.0
    %549 = vmatpush1.xpose.msra.mxu0 0.0
    %550 = vmatprep.subr.mxu0 0.0
    %551 = vmatpush1.xpose.msra.mxu0 0.0
    %552 = vmatprep.subr.mxu0 0.0
    %553 = vmatpush1.xpose.msra.mxu0 0.0
    %554 = vmatprep.subr.mxu0 0.0
    %555 = vmatpush1.xpose.msra.mxu0 0.0
    %556 = vmatprep.subr.mxu0 0.0
    %557 = vmatpush1.xpose.msra.mxu0 0.0
    %558 = vmatprep.subr.mxu0 0.0
    %559 = vmatpush1.xpose.msra.mxu0 0.0
    %560 = vmatprep.subr.mxu0 0.0
    %561 = vmatpush1.xpose.msra.mxu0 0.0
    %562 = vmatprep.subr.mxu0 0.0
    %563 = vmatpush1.xpose.msra.mxu0 0.0
    %564 = vmatprep.subr.mxu0 0.0
    %565 = vmatpush1.xpose.msra.mxu0 0.0
    %566 = vmatprep.subr.mxu0 0.0
    %567 = vmatpush1.xpose.msra.mxu0 0.0
    %568 = vmatprep.subr.mxu0 0.0
    %569 = vmatpush1.xpose.msra.mxu0 0.0
    %570 = vmatprep.subr.mxu0 0.0
    %571 = vmatpush1.xpose.msra.mxu0 0.0
    %572 = vmatprep.subr.mxu0 0.0
    %573 = vmatpush1.xpose.msra.mxu0 0.0
    %574 = vmatprep.subr.mxu0 0.0
    %575 = vmatpush1.xpose.msra.mxu0 0.0
    %576 = vmatprep.subr.mxu0 0.0
    %577 = vmatpush1.xpose.msra.mxu0 0.0
    %578 = vmatprep.subr.mxu0 0.0
    %579 = vmatpush1.xpose.msra.mxu0 0.0
    %580 = vmatprep.subr.mxu0 0.0
    %581 = vmatpush1.xpose.msra.mxu0 0.0
    %582 = vmatprep.subr.mxu0 0.0
    %583 = vmatpush1.xpose.msra.mxu0 0.0
    %584 = vmatprep.subr.mxu0 0.0
    %585 = vmatpush1.xpose.msra.mxu0 0.0
    %586 = vmatprep.subr.mxu0 0.0
    %587 = vmatpush1.xpose.msra.mxu0 0.0
    %588 = vmatprep.subr.mxu0 0.0
    %589 = vmatpush1.xpose.msra.mxu0 0.0
    %590 = vmatprep.subr.mxu0 0.0
    %591 = vmatpush1.xpose.msra.mxu0 0.0
    %592 = vmatprep.subr.mxu0 0.0
    %593 = vmatpush1.xpose.msra.mxu0 0.0
    %594 = vmatprep.subr.mxu0 0.0
    %595 = vmatpush1.xpose.msra.mxu0 0.0
    %596 = vmatprep.subr.mxu0 0.0
    %597 = vmatpush1.xpose.msra.mxu0 0.0
    %598 = vmatprep.subr.mxu0 0.0
    %599 = vmatpush1.xpose.msra.mxu0 0.0
    %600 = vmatprep.subr.mxu0 0.0
    %601 = vmatpush1.xpose.msra.mxu0 0.0
    %602 = vmatprep.subr.mxu0 0.0
    %603 = vmatpush1.xpose.msra.mxu0 0.0
    %604 = vmatprep.mubr.f32.mxu0 0.0
    %605 = vmatmul.mubr.f32.gmra.mrb[0].mxu0 %v536
    %v606 = vpop.f32.mrb[0].mxu0
    %v607 = vadd.f32 0.0, %v606
    %v608 = vpop.f32.mrb[0].mxu0
    %609 = vdwg.mxu0
    %v610 = vsel %vm205, %v187, 0
    %v613 = vsel %vm205, %v311, 0
    %615 = vmatprep.subr.mxu0 0.0
    %616 = vmatpush1.xpose.msra.mxu0 %v613
    %617 = vmatprep.subr.mxu0 0.0
    %618 = vmatpush1.xpose.msra.mxu0 0.0
    %619 = vmatprep.subr.mxu0 0.0
    %620 = vmatpush1.xpose.msra.mxu0 0.0
    %621 = vmatprep.subr.mxu0 0.0
    %622 = vmatpush1.xpose.msra.mxu0 0.0
    %623 = vmatprep.subr.mxu0 0.0
    %624 = vmatpush1.xpose.msra.mxu0 0.0
    %625 = vmatprep.subr.mxu0 0.0
    %626 = vmatpush1.xpose.msra.mxu0 0.0
    %627 = vmatprep.subr.mxu0 0.0
    %628 = vmatpush1.xpose.msra.mxu0 0.0
    %629 = vmatprep.subr.mxu0 0.0
    %630 = vmatpush1.xpose.msra.mxu0 0.0
    %631 = vmatprep.subr.mxu0 0.0
    %632 = vmatpush1.xpose.msra.mxu0 0.0
    %633 = vmatprep.subr.mxu0 0.0
    %634 = vmatpush1.xpose.msra.mxu0 0.0
    %635 = vmatprep.subr.mxu0 0.0
    %636 = vmatpush1.xpose.msra.mxu0 0.0
    %637 = vmatprep.subr.mxu0 0.0
    %638 = vmatpush1.xpose.msra.mxu0 0.0
    %639 = vmatprep.subr.mxu0 0.0
    %640 = vmatpush1.xpose.msra.mxu0 0.0
    %641 = vmatprep.subr.mxu0 0.0
    %642 = vmatpush1.xpose.msra.mxu0 0.0
    %643 = vmatprep.subr.mxu0 0.0
    %644 = vmatpush1.xpose.msra.mxu0 0.0
    %645 = vmatprep.subr.mxu0 0.0
    %646 = vmatpush1.xpose.msra.mxu0 0.0
    %647 = vmatprep.subr.mxu0 0.0
    %648 = vmatpush1.xpose.msra.mxu0 0.0
    %649 = vmatprep.subr.mxu0 0.0
    %650 = vmatpush1.xpose.msra.mxu0 0.0
    %651 = vmatprep.subr.mxu0 0.0
    %652 = vmatpush1.xpose.msra.mxu0 0.0
    %653 = vmatprep.subr.mxu0 0.0
    %654 = vmatpush1.xpose.msra.mxu0 0.0
    %655 = vmatprep.subr.mxu0 0.0
    %656 = vmatpush1.xpose.msra.mxu0 0.0
    %657 = vmatprep.subr.mxu0 0.0
    %658 = vmatpush1.xpose.msra.mxu0 0.0
    %659 = vmatprep.subr.mxu0 0.0
    %660 = vmatpush1.xpose.msra.mxu0 0.0
    %661 = vmatprep.subr.mxu0 0.0
    %662 = vmatpush1.xpose.msra.mxu0 0.0
    %663 = vmatprep.subr.mxu0 0.0
    %664 = vmatpush1.xpose.msra.mxu0 0.0
    %665 = vmatprep.subr.mxu0 0.0
    %666 = vmatpush1.xpose.msra.mxu0 0.0
    %667 = vmatprep.subr.mxu0 0.0
    %668 = vmatpush1.xpose.msra.mxu0 0.0
    %669 = vmatprep.subr.mxu0 0.0
    %670 = vmatpush1.xpose.msra.mxu0 0.0
    %671 = vmatprep.subr.mxu0 0.0
    %672 = vmatpush1.xpose.msra.mxu0 0.0
    %673 = vmatprep.subr.mxu0 0.0
    %674 = vmatpush1.xpose.msra.mxu0 0.0
    %675 = vmatprep.subr.mxu0 0.0
    %676 = vmatpush1.xpose.msra.mxu0 0.0
    %677 = vmatprep.subr.mxu0 0.0
    %678 = vmatpush1.xpose.msra.mxu0 0.0
    %679 = vmatprep.mubr.f32.mxu0 0.0
    %680 = vmatmul.mubr.f32.gmra.mrb[0].mxu0 %v610
    %v681 = vpop.f32.mrb[0].mxu0
    %v682 = vadd.f32 %v607, %v681
    %v683 = vpop.f32.mrb[0].mxu0
    %684 = vdwg.mxu0
    %v685 = vmul.f32 %v682, 0.20412415
    %v686 = vadd.f32 %v685, %v77
    %v687 = vsel %vm335, %v686, -inf
    %688 = vmax.xlane.f32.xlu0 %v687
    %v689 = vpop.xlane.xlu0 %688
    %v690 = vsub.f32 %v686, %v689
    %v691 = vmul.f32 %v690, 1.442695
    %v692 = vpow.pop %v691
    %v693 = vsel %vm335, %v692, 0.0
    %694 = vadd.xlane.f32.xlu0 %v693
    %v695 = vpop.xlane.xlu0 %694
    %v696 = vrcp.pop %v695
    %v697 = vmul.f32 %v692, %v696
    %698 = vrot.lane.b32.xlu0 %v311, 112
    %v699 = vpop.permute.xlu0 %698
    %v702 = vsel %vm335, %v697, 0
    %704 = vmatprep.subr.mxu0 0.0
    %705 = vmatpush1.msra.mxu0 %v699
    %706 = vmatprep.subr.mxu0 0.0
    %707 = vmatpush1.msra.mxu0 0.0
    %708 = vmatprep.subr.mxu0 0.0
    %709 = vmatpush1.msra.mxu0 0.0
    %710 = vmatprep.subr.mxu0 0.0
    %711 = vmatpush1.msra.mxu0 0.0
    %712 = vmatprep.subr.mxu0 0.0
    %713 = vmatpush1.msra.mxu0 0.0
    %714 = vmatprep.subr.mxu0 0.0
    %715 = vmatpush1.msra.mxu0 0.0
    %716 = vmatprep.subr.mxu0 0.0
    %717 = vmatpush1.msra.mxu0 0.0
    %718 = vmatprep.subr.mxu0 0.0
    %719 = vmatpush1.msra.mxu0 0.0
    %720 = vmatprep.subr.mxu0 0.0
    %721 = vmatpush1.msra.mxu0 0.0
    %722 = vmatprep.subr.mxu0 0.0
    %723 = vmatpush1.msra.mxu0 0.0
    %724 = vmatprep.subr.mxu0 0.0
    %725 = vmatpush1.msra.mxu0 0.0
    %726 = vmatprep.subr.mxu0 0.0
    %727 = vmatpush1.msra.mxu0 0.0
    %728 = vmatprep.subr.mxu0 0.0
    %729 = vmatpush1.msra.mxu0 0.0
    %730 = vmatprep.subr.mxu0 0.0
    %731 = vmatpush1.msra.mxu0 0.0
    %732 = vmatprep.subr.mxu0 0.0
    %733 = vmatpush1.msra.mxu0 0.0
    %734 = vmatprep.subr.mxu0 0.0
    %735 = vmatpush1.msra.mxu0 0.0
    %736 = vmatprep.subr.mxu0 0.0
    %737 = vmatpush1.msra.mxu0 0.0
    %738 = vmatprep.subr.mxu0 0.0
    %739 = vmatpush1.msra.mxu0 0.0
    %740 = vmatprep.subr.mxu0 0.0
    %741 = vmatpush1.msra.mxu0 0.0
    %742 = vmatprep.subr.mxu0 0.0
    %743 = vmatpush1.msra.mxu0 0.0
    %744 = vmatprep.subr.mxu0 0.0
    %745 = vmatpush1.msra.mxu0 0.0
    %746 = vmatprep.subr.mxu0 0.0
    %747 = vmatpush1.msra.mxu0 0.0
    %748 = vmatprep.subr.mxu0 0.0
    %749 = vmatpush1.msra.mxu0 0.0
    %750 = vmatprep.subr.mxu0 0.0
    %751 = vmatpush1.msra.mxu0 0.0
    %752 = vmatprep.subr.mxu0 0.0
    %753 = vmatpush1.msra.mxu0 0.0
    %754 = vmatprep.subr.mxu0 0.0
    %755 = vmatpush1.msra.mxu0 0.0
    %756 = vmatprep.subr.mxu0 0.0
    %757 = vmatpush1.msra.mxu0 0.0
    %758 = vmatprep.subr.mxu0 0.0
    %759 = vmatpush1.msra.mxu0 0.0
    %760 = vmatprep.subr.mxu0 0.0
    %761 = vmatpush1.msra.mxu0 0.0
    %762 = vmatprep.subr.mxu0 0.0
    %763 = vmatpush1.msra.mxu0 0.0
    %764 = vmatprep.subr.mxu0 0.0
    %765 = vmatpush1.msra.mxu0 0.0
    %766 = vmatprep.subr.mxu0 0.0
    %767 = vmatpush1.msra.mxu0 0.0
    %768 = vmatprep.mubr.f32.mxu0 0.0
    %769 = vmatmul.mubr.f32.gmra.mrb[0].mxu0 %v702
    %v770 = vpop.f32.mrb[0].mxu0
    %v771 = vadd.f32 0.0, %v770
    %v772 = vpop.f32.mrb[0].mxu0
    %773 = vdwg.mxu0
    %775 = vrot.lane.b32.xlu0 %v529, 112
    %v776 = vpop.permute.xlu0 %775
    %778 = vrot.lane.b32.xlu0 %v426, 64
    %v779 = vpop.permute.xlu0 %778
    %v780 = vsel %vm335, %v776, 0
    %v782 = vsel %vm335, %v779, 0
    %784 = vmatprep.subr.mxu0 0.0
    %785 = vmatpush1.xpose.msra.mxu0 %v782
    %786 = vmatprep.subr.mxu0 0.0
    %787 = vmatpush1.xpose.msra.mxu0 0.0
    %788 = vmatprep.subr.mxu0 0.0
    %789 = vmatpush1.xpose.msra.mxu0 0.0
    %790 = vmatprep.subr.mxu0 0.0
    %791 = vmatpush1.xpose.msra.mxu0 0.0
    %792 = vmatprep.subr.mxu0 0.0
    %793 = vmatpush1.xpose.msra.mxu0 0.0
    %794 = vmatprep.subr.mxu0 0.0
    %795 = vmatpush1.xpose.msra.mxu0 0.0
    %796 = vmatprep.subr.mxu0 0.0
    %797 = vmatpush1.xpose.msra.mxu0 0.0
    %798 = vmatprep.subr.mxu0 0.0
    %799 = vmatpush1.xpose.msra.mxu0 0.0
    %800 = vmatprep.subr.mxu0 0.0
    %801 = vmatpush1.xpose.msra.mxu0 0.0
    %802 = vmatprep.subr.mxu0 0.0
    %803 = vmatpush1.xpose.msra.mxu0 0.0
    %804 = vmatprep.subr.mxu0 0.0
    %805 = vmatpush1.xpose.msra.mxu0 0.0
    %806 = vmatprep.subr.mxu0 0.0
    %807 = vmatpush1.xpose.msra.mxu0 0.0
    %808 = vmatprep.subr.mxu0 0.0
    %809 = vmatpush1.xpose.msra.mxu0 0.0
    %810 = vmatprep.subr.mxu0 0.0
    %811 = vmatpush1.xpose.msra.mxu0 0.0
    %812 = vmatprep.subr.mxu0 0.0
    %813 = vmatpush1.xpose.msra.mxu0 0.0
    %814 = vmatprep.subr.mxu0 0.0
    %815 = vmatpush1.xpose.msra.mxu0 0.0
    %816 = vmatprep.subr.mxu0 0.0
    %817 = vmatpush1.xpose.msra.mxu0 0.0
    %818 = vmatprep.subr.mxu0 0.0
    %819 = vmatpush1.xpose.msra.mxu0 0.0
    %820 = vmatprep.subr.mxu0 0.0
    %821 = vmatpush1.xpose.msra.mxu0 0.0
    %822 = vmatprep.subr.mxu0 0.0
    %823 = vmatpush1.xpose.msra.mxu0 0.0
    %824 = vmatprep.subr.mxu0 0.0
    %825 = vmatpush1.xpose.msra.mxu0 0.0
    %826 = vmatprep.subr.mxu0 0.0
    %827 = vmatpush1.xpose.msra.mxu0 0.0
    %828 = vmatprep.subr.mxu0 0.0
    %829 = vmatpush1.xpose.msra.mxu0 0.0
    %830 = vmatprep.subr.mxu0 0.0
    %831 = vmatpush1.xpose.msra.mxu0 0.0
    %832 = vmatprep.subr.mxu0 0.0
    %833 = vmatpush1.xpose.msra.mxu0 0.0
    %834 = vmatprep.subr.mxu0 0.0
    %835 = vmatpush1.xpose.msra.mxu0 0.0
    %836 = vmatprep.subr.mxu0 0.0
    %837 = vmatpush1.xpose.msra.mxu0 0.0
    %838 = vmatprep.subr.mxu0 0.0
    %839 = vmatpush1.xpose.msra.mxu0 0.0
    %840 = vmatprep.subr.mxu0 0.0
    %841 = vmatpush1.xpose.msra.mxu0 0.0
    %842 = vmatprep.subr.mxu0 0.0
    %843 = vmatpush1.xpose.msra.mxu0 0.0
    %844 = vmatprep.subr.mxu0 0.0
    %845 = vmatpush1.xpose.msra.mxu0 0.0
    %846 = vmatprep.subr.mxu0 0.0
    %847 = vmatpush1.xpose.msra.mxu0 0.0
    %848 = vmatprep.mubr.f32.mxu0 0.0
    %849 = vmatmul.mubr.f32.gmra.mrb[0].mxu0 %v780
    %v850 = vpop.f32.mrb[0].mxu0
    %v851 = vadd.f32 0.0, %v850
    %v852 = vpop.f32.mrb[0].mxu0
    %853 = vdwg.mxu0
    %v854 = vsel %vm205, %v192, 0
    %v857 = vsel %vm205, %v316, 0
    %859 = vmatprep.subr.mxu0 0.0
    %860 = vmatpush1.xpose.msra.mxu0 %v857
    %861 = vmatprep.subr.mxu0 0.0
    %862 = vmatpush1.xpose.msra.mxu0 0.0
    %863 = vmatprep.subr.mxu0 0.0
    %864 = vmatpush1.xpose.msra.mxu0 0.0
    %865 = vmatprep.subr.mxu0 0.0
    %866 = vmatpush1.xpose.msra.mxu0 0.0
    %867 = vmatprep.subr.mxu0 0.0
    %868 = vmatpush1.xpose.msra.mxu0 0.0
    %869 = vmatprep.subr.mxu0 0.0
    %870 = vmatpush1.xpose.msra.mxu0 0.0
    %871 = vmatprep.subr.mxu0 0.0
    %872 = vmatpush1.xpose.msra.mxu0 0.0
    %873 = vmatprep.subr.mxu0 0.0
    %874 = vmatpush1.xpose.msra.mxu0 0.0
    %875 = vmatprep.subr.mxu0 0.0
    %876 = vmatpush1.xpose.msra.mxu0 0.0
    %877 = vmatprep.subr.mxu0 0.0
    %878 = vmatpush1.xpose.msra.mxu0 0.0
    %879 = vmatprep.subr.mxu0 0.0
    %880 = vmatpush1.xpose.msra.mxu0 0.0
    %881 = vmatprep.subr.mxu0 0.0
    %882 = vmatpush1.xpose.msra.mxu0 0.0
    %883 = vmatprep.subr.mxu0 0.0
    %884 = vmatpush1.xpose.msra.mxu0 0.0
    %885 = vmatprep.subr.mxu0 0.0
    %886 = vmatpush1.xpose.msra.mxu0 0.0
    %887 = vmatprep.subr.mxu0 0.0
    %888 = vmatpush1.xpose.msra.mxu0 0.0
    %889 = vmatprep.subr.mxu0 0.0
    %890 = vmatpush1.xpose.msra.mxu0 0.0
    %891 = vmatprep.subr.mxu0 0.0
    %892 = vmatpush1.xpose.msra.mxu0 0.0
    %893 = vmatprep.subr.mxu0 0.0
    %894 = vmatpush1.xpose.msra.mxu0 0.0
    %895 = vmatprep.subr.mxu0 0.0
    %896 = vmatpush1.xpose.msra.mxu0 0.0
    %897 = vmatprep.subr.mxu0 0.0
    %898 = vmatpush1.xpose.msra.mxu0 0.0
    %899 = vmatprep.subr.mxu0 0.0
    %900 = vmatpush1.xpose.msra.mxu0 0.0
    %901 = vmatprep.subr.mxu0 0.0
    %902 = vmatpush1.xpose.msra.mxu0 0.0
    %903 = vmatprep.subr.mxu0 0.0
    %904 = vmatpush1.xpose.msra.mxu0 0.0
    %905 = vmatprep.subr.mxu0 0.0
    %906 = vmatpush1.xpose.msra.mxu0 0.0
    %907 = vmatprep.subr.mxu0 0.0
    %908 = vmatpush1.xpose.msra.mxu0 0.0
    %909 = vmatprep.subr.mxu0 0.0
    %910 = vmatpush1.xpose.msra.mxu0 0.0
    %911 = vmatprep.subr.mxu0 0.0
    %912 = vmatpush1.xpose.msra.mxu0 0.0
    %913 = vmatprep.subr.mxu0 0.0
    %914 = vmatpush1.xpose.msra.mxu0 0.0
    %915 = vmatprep.subr.mxu0 0.0
    %916 = vmatpush1.xpose.msra.mxu0 0.0
    %917 = vmatprep.subr.mxu0 0.0
    %918 = vmatpush1.xpose.msra.mxu0 0.0
    %919 = vmatprep.subr.mxu0 0.0
    %920 = vmatpush1.xpose.msra.mxu0 0.0
    %921 = vmatprep.subr.mxu0 0.0
    %922 = vmatpush1.xpose.msra.mxu0 0.0
    %923 = vmatprep.mubr.f32.mxu0 0.0
    %924 = vmatmul.mubr.f32.gmra.mrb[0].mxu0 %v854
    %v925 = vpop.f32.mrb[0].mxu0
    %v926 = vadd.f32 %v851, %v925
    %v927 = vpop.f32.mrb[0].mxu0
    %928 = vdwg.mxu0
    %v929 = vmul.f32 %v926, 0.20412415
    %v930 = vadd.f32 %v929, %v77
    %v931 = vsel %vm335, %v930, -inf
    %932 = vmax.xlane.f32.xlu0 %v931
    %v933 = vpop.xlane.xlu0 %932
    %v934 = vsub.f32 %v930, %v933
    %v935 = vmul.f32 %v934, 1.442695
    %v936 = vpow.pop %v935
    %v937 = vsel %vm335, %v936, 0.0
    %938 = vadd.xlane.f32.xlu0 %v937
    %v939 = vpop.xlane.xlu0 %938
    %v940 = vrcp.pop %v939
    %v941 = vmul.f32 %v936, %v940
    %942 = vrot.lane.b32.xlu0 %v316, 112
    %v943 = vpop.permute.xlu0 %942
    %v946 = vsel %vm335, %v941, 0
    %948 = vmatprep.subr.mxu0 0.0
    %949 = vmatpush1.msra.mxu0 %v943
    %950 = vmatprep.subr.mxu0 0.0
    %951 = vmatpush1.msra.mxu0 0.0
    %952 = vmatprep.subr.mxu0 0.0
    %953 = vmatpush1.msra.mxu0 0.0
    %954 = vmatprep.subr.mxu0 0.0
    %955 = vmatpush1.msra.mxu0 0.0
    %956 = vmatprep.subr.mxu0 0.0
    %957 = vmatpush1.msra.mxu0 0.0
    %958 = vmatprep.subr.mxu0 0.0
    %959 = vmatpush1.msra.mxu0 0.0
    %960 = vmatprep.subr.mxu0 0.0
    %961 = vmatpush1.msra.mxu0 0.0
    %962 = vmatprep.subr.mxu0 0.0
    %963 = vmatpush1.msra.mxu0 0.0
    %964 = vmatprep.subr.mxu0 0.0
    %965 = vmatpush1.msra.mxu0 0.0
    %966 = vmatprep.subr.mxu0 0.0
    %967 = vmatpush1.msra.mxu0 0.0
    %968 = vmatprep.subr.mxu0 0.0
    %969 = vmatpush1.msra.mxu0 0.0
    %970 = vmatprep.subr.mxu0 0.0
    %971 = vmatpush1.msra.mxu0 0.0
    %972 = vmatprep.subr.mxu0 0.0
    %973 = vmatpush1.msra.mxu0 0.0
    %974 = vmatprep.subr.mxu0 0.0
    %975 = vmatpush1.msra.mxu0 0.0
    %976 = vmatprep.subr.mxu0 0.0
    %977 = vmatpush1.msra.mxu0 0.0
    %978 = vmatprep.subr.mxu0 0.0
    %979 = vmatpush1.msra.mxu0 0.0
    %980 = vmatprep.subr.mxu0 0.0
    %981 = vmatpush1.msra.mxu0 0.0
    %982 = vmatprep.subr.mxu0 0.0
    %983 = vmatpush1.msra.mxu0 0.0
    %984 = vmatprep.subr.mxu0 0.0
    %985 = vmatpush1.msra.mxu0 0.0
    %986 = vmatprep.subr.mxu0 0.0
    %987 = vmatpush1.msra.mxu0 0.0
    %988 = vmatprep.subr.mxu0 0.0
    %989 = vmatpush1.msra.mxu0 0.0
    %990 = vmatprep.subr.mxu0 0.0
    %991 = vmatpush1.msra.mxu0 0.0
    %992 = vmatprep.subr.mxu0 0.0
    %993 = vmatpush1.msra.mxu0 0.0
    %994 = vmatprep.subr.mxu0 0.0
    %995 = vmatpush1.msra.mxu0 0.0
    %996 = vmatprep.subr.mxu0 0.0
    %997 = vmatpush1.msra.mxu0 0.0
    %998 = vmatprep.subr.mxu0 0.0
    %999 = vmatpush1.msra.mxu0 0.0
    %1000 = vmatprep.subr.mxu0 0.0
    %1001 = vmatpush1.msra.mxu0 0.0
    %1002 = vmatprep.subr.mxu0 0.0
    %1003 = vmatpush1.msra.mxu0 0.0
    %1004 = vmatprep.subr.mxu0 0.0
    %1005 = vmatpush1.msra.mxu0 0.0
    %1006 = vmatprep.subr.mxu0 0.0
    %1007 = vmatpush1.msra.mxu0 0.0
    %1008 = vmatprep.subr.mxu0 0.0
    %1009 = vmatpush1.msra.mxu0 0.0
    %1010 = vmatprep.subr.mxu0 0.0
    %1011 = vmatpush1.msra.mxu0 0.0
    %1012 = vmatprep.mubr.f32.mxu0 0.0
    %1013 = vmatmul.mubr.f32.gmra.mrb[0].mxu0 %v946
    %v1014 = vpop.f32.mrb[0].mxu0
    %v1015 = vadd.f32 0.0, %v1014
    %v1016 = vpop.f32.mrb[0].mxu0
    %1017 = vdwg.mxu0
    %v1018 = vld [vmem:[%s10] sm:$0xff]
    %v1019 = vld [vmem:[%s10 + $0x8] sm:$0xff]
    %1020 = vrot.lane.b32.xlu0 %v78, 40
    %v1021 = vpop.permute.xlu0 %1020
    %1022 = vrot.lane.b32.xlu0 %v79, 40
    %v1023 = vpop.permute.xlu0 %1022
    %v1026 = vmul.f32 %v187, %v1021
    %v1027 = vmul.f32 %v192, %v1023
    %1028 = vrot.lane.b32.xlu0 %v187, 88
    %v1029 = vpop.permute.xlu0 %1028
    %1030 = vrot.lane.b32.xlu0 %v192, 88
    %v1031 = vpop.permute.xlu0 %1030
    %v1032 = vsel %vm335, %v1029, 0
    %v1034 = vsel %vm335, %v1031, 0
    %1036 = vmatprep.subr.mxu0 0.0
    %1037 = vmatpush1.msra.mxu0 %v82
    %1038 = vmatprep.subr.mxu0 0.0
    %1039 = vmatpush1.msra.mxu0 0.0
    %1040 = vmatprep.subr.mxu0 0.0
    %1041 = vmatpush1.msra.mxu0 0.0
    %1042 = vmatprep.subr.mxu0 0.0
    %1043 = vmatpush1.msra.mxu0 0.0
    %1044 = vmatprep.subr.mxu0 0.0
    %1045 = vmatpush1.msra.mxu0 0.0
    %1046 = vmatprep.subr.mxu0 0.0
    %1047 = vmatpush1.msra.mxu0 0.0
    %1048 = vmatprep.subr.mxu0 0.0
    %1049 = vmatpush1.msra.mxu0 0.0
    %1050 = vmatprep.subr.mxu0 0.0
    %1051 = vmatpush1.msra.mxu0 0.0
    %1052 = vmatprep.subr.mxu0 0.0
    %1053 = vmatpush1.msra.mxu0 0.0
    %1054 = vmatprep.subr.mxu0 0.0
    %1055 = vmatpush1.msra.mxu0 0.0
    %1056 = vmatprep.subr.mxu0 0.0
    %1057 = vmatpush1.msra.mxu0 0.0
    %1058 = vmatprep.subr.mxu0 0.0
    %1059 = vmatpush1.msra.mxu0 0.0
    %1060 = vmatprep.subr.mxu0 0.0
    %1061 = vmatpush1.msra.mxu0 0.0
    %1062 = vmatprep.subr.mxu0 0.0
    %1063 = vmatpush1.msra.mxu0 0.0
    %1064 = vmatprep.subr.mxu0 0.0
    %1065 = vmatpush1.msra.mxu0 0.0
    %1066 = vmatprep.subr.mxu0 0.0
    %1067 = vmatpush1.msra.mxu0 0.0
    %1068 = vmatprep.subr.mxu0 0.0
    %1069 = vmatpush1.msra.mxu0 0.0
    %1070 = vmatprep.subr.mxu0 0.0
    %1071 = vmatpush1.msra.mxu0 0.0
    %1072 = vmatprep.subr.mxu0 0.0
    %1073 = vmatpush1.msra.mxu0 0.0
    %1074 = vmatprep.subr.mxu0 0.0
    %1075 = vmatpush1.msra.mxu0 0.0
    %1076 = vmatprep.subr.mxu0 0.0
    %1077 = vmatpush1.msra.mxu0 0.0
    %1078 = vmatprep.subr.mxu0 0.0
    %1079 = vmatpush1.msra.mxu0 0.0
    %1080 = vmatprep.subr.mxu0 0.0
    %1081 = vmatpush1.msra.mxu0 0.0
    %1082 = vmatprep.subr.mxu0 0.0
    %1083 = vmatpush1.msra.mxu0 0.0
    %1084 = vmatprep.subr.mxu0 0.0
    %1085 = vmatpush1.msra.mxu0 0.0
    %1086 = vmatprep.subr.mxu0 0.0
    %1087 = vmatpush1.msra.mxu0 0.0
    %1088 = vmatprep.subr.mxu0 0.0
    %1089 = vmatpush1.msra.mxu0 0.0
    %1090 = vmatprep.subr.mxu0 0.0
    %1091 = vmatpush1.msra.mxu0 0.0
    %1092 = vmatprep.subr.mxu0 0.0
    %1093 = vmatpush1.msra.mxu0 0.0
    %1094 = vmatprep.subr.mxu0 0.0
    %1095 = vmatpush1.msra.mxu0 0.0
    %1096 = vmatprep.subr.mxu0 0.0
    %1097 = vmatpush1.msra.mxu0 0.0
    %1098 = vmatprep.subr.mxu0 0.0
    %1099 = vmatpush1.msra.mxu0 0.0
    %1100 = vmatprep.mubr.f32.mxu0 0.0
    %1101 = vmatmul.mubr.f32.gmra.mrb[0].mxu0 %v1032
    %v1102 = vpop.f32.mrb[0].mxu0
    %v1103 = vadd.f32 0.0, %v1102
    %v1104 = vpop.f32.mrb[0].mxu0
    %1105 = vmatprep.mubr.f32.mxu0 0.0
    %1106 = vmatmul.mubr.f32.gmra.mrb[0].mxu0 %v1034
    %v1107 = vpop.f32.mrb[0].mxu0
    %v1108 = vadd.f32 0.0, %v1107
    %v1109 = vpop.f32.mrb[0].mxu0
    %1110 = vdwg.mxu0
    %v1111 = vmul.f32 %v1103, %v80
    %v1112 = vmul.f32 %v1108, %v81
    %1115 = vrot.lane.b32.xlu0 %v1111, 40
    %v1116 = vpop.permute.xlu0 %1115
    %1117 = vrot.lane.b32.xlu0 %v1112, 40
    %v1118 = vpop.permute.xlu0 %1117
    %v1121 = vadd.f32 %v1026, %v1116
    %v1122 = vadd.f32 %v1027, %v1118
    %1124 = vrot.lane.b32.xlu0 %v1121, 88
    %v1125 = vpop.permute.xlu0 %1124
    %v1126 = vsel %vm335, %v1125, 0
    %1128 = vmatprep.subr.mxu0 0.0
    %1129 = vmatpush1.xpose.msra.mxu0 %v538
    %1130 = vmatprep.subr.mxu0 0.0
    %1131 = vmatpush1.xpose.msra.mxu0 0.0
    %1132 = vmatprep.subr.mxu0 0.0
    %1133 = vmatpush1.xpose.msra.mxu0 0.0
    %1134 = vmatprep.subr.mxu0 0.0
    %1135 = vmatpush1.xpose.msra.mxu0 0.0
    %1136 = vmatprep.subr.mxu0 0.0
    %1137 = vmatpush1.xpose.msra.mxu0 0.0
    %1138 = vmatprep.subr.mxu0 0.0
    %1139 = vmatpush1.xpose.msra.mxu0 0.0
    %1140 = vmatprep.subr.mxu0 0.0
    %1141 = vmatpush1.xpose.msra.mxu0 0.0
    %1142 = vmatprep.subr.mxu0 0.0
    %1143 = vmatpush1.xpose.msra.mxu0 0.0
    %1144 = vmatprep.subr.mxu0 0.0
    %1145 = vmatpush1.xpose.msra.mxu0 0.0
    %1146 = vmatprep.subr.mxu0 0.0
    %1147 = vmatpush1.xpose.msra.mxu0 0.0
    %1148 = vmatprep.subr.mxu0 0.0
    %1149 = vmatpush1.xpose.msra.mxu0 0.0
    %1150 = vmatprep.subr.mxu0 0.0
    %1151 = vmatpush1.xpose.msra.mxu0 0.0
    %1152 = vmatprep.subr.mxu0 0.0
    %1153 = vmatpush1.xpose.msra.mxu0 0.0
    %1154 = vmatprep.subr.mxu0 0.0
    %1155 = vmatpush1.xpose.msra.mxu0 0.0
    %1156 = vmatprep.subr.mxu0 0.0
    %1157 = vmatpush1.xpose.msra.mxu0 0.0
    %1158 = vmatprep.subr.mxu0 0.0
    %1159 = vmatpush1.xpose.msra.mxu0 0.0
    %1160 = vmatprep.subr.mxu0 0.0
    %1161 = vmatpush1.xpose.msra.mxu0 0.0
    %1162 = vmatprep.subr.mxu0 0.0
    %1163 = vmatpush1.xpose.msra.mxu0 0.0
    %1164 = vmatprep.subr.mxu0 0.0
    %1165 = vmatpush1.xpose.msra.mxu0 0.0
    %1166 = vmatprep.subr.mxu0 0.0
    %1167 = vmatpush1.xpose.msra.mxu0 0.0
    %1168 = vmatprep.subr.mxu0 0.0
    %1169 = vmatpush1.xpose.msra.mxu0 0.0
    %1170 = vmatprep.subr.mxu0 0.0
    %1171 = vmatpush1.xpose.msra.mxu0 0.0
    %1172 = vmatprep.subr.mxu0 0.0
    %1173 = vmatpush1.xpose.msra.mxu0 0.0
    %1174 = vmatprep.subr.mxu0 0.0
    %1175 = vmatpush1.xpose.msra.mxu0 0.0
    %1176 = vmatprep.subr.mxu0 0.0
    %1177 = vmatpush1.xpose.msra.mxu0 0.0
    %1178 = vmatprep.subr.mxu0 0.0
    %1179 = vmatpush1.xpose.msra.mxu0 0.0
    %1180 = vmatprep.subr.mxu0 0.0
    %1181 = vmatpush1.xpose.msra.mxu0 0.0
    %1182 = vmatprep.subr.mxu0 0.0
    %1183 = vmatpush1.xpose.msra.mxu0 0.0
    %1184 = vmatprep.subr.mxu0 0.0
    %1185 = vmatpush1.xpose.msra.mxu0 0.0
    %1186 = vmatprep.subr.mxu0 0.0
    %1187 = vmatpush1.xpose.msra.mxu0 0.0
    %1188 = vmatprep.subr.mxu0 0.0
    %1189 = vmatpush1.xpose.msra.mxu0 0.0
    %1190 = vmatprep.subr.mxu0 0.0
    %1191 = vmatpush1.xpose.msra.mxu0 0.0
    %1192 = vmatprep.mubr.f32.mxu0 0.0
    %1193 = vmatmul.mubr.f32.gmra.mrb[0].mxu0 %v1126
    %v1194 = vpop.f32.mrb[0].mxu0
    %v1195 = vadd.f32 0.0, %v1194
    %v1196 = vpop.f32.mrb[0].mxu0
    %1197 = vdwg.mxu0
    %1198 = vrot.lane.b32.xlu0 %v187, 104
    %v1199 = vpop.permute.xlu0 %1198
    %1200 = vrot.lane.b32.xlu0 %v311, 96
    %v1201 = vpop.permute.xlu0 %1200
    %v1202 = vsel %vm205, %v1199, 0
    %v1204 = vsel %vm205, %v1201, 0
    %1206 = vmatprep.subr.mxu0 0.0
    %1207 = vmatpush1.xpose.msra.mxu0 %v1204
    %1208 = vmatprep.subr.mxu0 0.0
    %1209 = vmatpush1.xpose.msra.mxu0 0.0
    %1210 = vmatprep.subr.mxu0 0.0
    %1211 = vmatpush1.xpose.msra.mxu0 0.0
    %1212 = vmatprep.subr.mxu0 0.0
    %1213 = vmatpush1.xpose.msra.mxu0 0.0
    %1214 = vmatprep.subr.mxu0 0.0
    %1215 = vmatpush1.xpose.msra.mxu0 0.0
    %1216 = vmatprep.subr.mxu0 0.0
    %1217 = vmatpush1.xpose.msra.mxu0 0.0
    %1218 = vmatprep.subr.mxu0 0.0
    %1219 = vmatpush1.xpose.msra.mxu0 0.0
    %1220 = vmatprep.subr.mxu0 0.0
    %1221 = vmatpush1.xpose.msra.mxu0 0.0
    %1222 = vmatprep.subr.mxu0 0.0
    %1223 = vmatpush1.xpose.msra.mxu0 0.0
    %1224 = vmatprep.subr.mxu0 0.0
    %1225 = vmatpush1.xpose.msra.mxu0 0.0
    %1226 = vmatprep.subr.mxu0 0.0
    %1227 = vmatpush1.xpose.msra.mxu0 0.0
    %1228 = vmatprep.subr.mxu0 0.0
    %1229 = vmatpush1.xpose.msra.mxu0 0.0
    %1230 = vmatprep.subr.mxu0 0.0
    %1231 = vmatpush1.xpose.msra.mxu0 0.0
    %1232 = vmatprep.subr.mxu0 0.0
    %1233 = vmatpush1.xpose.msra.mxu0 0.0
    %1234 = vmatprep.subr.mxu0 0.0
    %1235 = vmatpush1.xpose.msra.mxu0 0.0
    %1236 = vmatprep.subr.mxu0 0.0
    %1237 = vmatpush1.xpose.msra.mxu0 0.0
    %1238 = vmatprep.subr.mxu0 0.0
    %1239 = vmatpush1.xpose.msra.mxu0 0.0
    %1240 = vmatprep.subr.mxu0 0.0
    %1241 = vmatpush1.xpose.msra.mxu0 0.0
    %1242 = vmatprep.subr.mxu0 0.0
    %1243 = vmatpush1.xpose.msra.mxu0 0.0
    %1244 = vmatprep.subr.mxu0 0.0
    %1245 = vmatpush1.xpose.msra.mxu0 0.0
    %1246 = vmatprep.subr.mxu0 0.0
    %1247 = vmatpush1.xpose.msra.mxu0 0.0
    %1248 = vmatprep.subr.mxu0 0.0
    %1249 = vmatpush1.xpose.msra.mxu0 0.0
    %1250 = vmatprep.subr.mxu0 0.0
    %1251 = vmatpush1.xpose.msra.mxu0 0.0
    %1252 = vmatprep.subr.mxu0 0.0
    %1253 = vmatpush1.xpose.msra.mxu0 0.0
    %1254 = vmatprep.subr.mxu0 0.0
    %1255 = vmatpush1.xpose.msra.mxu0 0.0
    %1256 = vmatprep.subr.mxu0 0.0
    %1257 = vmatpush1.xpose.msra.mxu0 0.0
    %1258 = vmatprep.subr.mxu0 0.0
    %1259 = vmatpush1.xpose.msra.mxu0 0.0
    %1260 = vmatprep.subr.mxu0 0.0
    %1261 = vmatpush1.xpose.msra.mxu0 0.0
    %1262 = vmatprep.subr.mxu0 0.0
    %1263 = vmatpush1.xpose.msra.mxu0 0.0
    %1264 = vmatprep.subr.mxu0 0.0
    %1265 = vmatpush1.xpose.msra.mxu0 0.0
    %1266 = vmatprep.subr.mxu0 0.0
    %1267 = vmatpush1.xpose.msra.mxu0 0.0
    %1268 = vmatprep.subr.mxu0 0.0
    %1269 = vmatpush1.xpose.msra.mxu0 0.0
    %1270 = vmatprep.mubr.f32.mxu0 0.0
    %1271 = vmatmul.mubr.f32.gmra.mrb[0].mxu0 %v1202
    %v1272 = vpop.f32.mrb[0].mxu0
    %v1273 = vadd.f32 %v1195, %v1272
    %v1274 = vpop.f32.mrb[0].mxu0
    %1275 = vdwg.mxu0
    %v1276 = vmul.f32 %v1273, 0.20412415
    %v1277 = vadd.f32 %v1276, %v77
    %v1278 = vsel %vm335, %v1277, -inf
    %1279 = vmax.xlane.f32.xlu0 %v1278
    %v1280 = vpop.xlane.xlu0 %1279
    %v1281 = vsub.f32 %v1277, %v1280
    %v1282 = vmul.f32 %v1281, 1.442695
    %v1283 = vpow.pop %v1282
    %v1284 = vsel %vm335, %v1283, 0.0
    %1285 = vadd.xlane.f32.xlu0 %v1284
    %v1286 = vpop.xlane.xlu0 %1285
    %v1287 = vrcp.pop %v1286
    %v1288 = vmul.f32 %v1283, %v1287
    %1289 = vrot.lane.b32.xlu0 %v311, 80
    %v1290 = vpop.permute.xlu0 %1289
    %v1293 = vsel %vm335, %v1288, 0
    %1295 = vmatprep.subr.mxu0 0.0
    %1296 = vmatpush1.msra.mxu0 %v1290
    %1297 = vmatprep.subr.mxu0 0.0
    %1298 = vmatpush1.msra.mxu0 0.0
    %1299 = vmatprep.subr.mxu0 0.0
    %1300 = vmatpush1.msra.mxu0 0.0
    %1301 = vmatprep.subr.mxu0 0.0
    %1302 = vmatpush1.msra.mxu0 0.0
    %1303 = vmatprep.subr.mxu0 0.0
    %1304 = vmatpush1.msra.mxu0 0.0
    %1305 = vmatprep.subr.mxu0 0.0
    %1306 = vmatpush1.msra.mxu0 0.0
    %1307 = vmatprep.subr.mxu0 0.0
    %1308 = vmatpush1.msra.mxu0 0.0
    %1309 = vmatprep.subr.mxu0 0.0
    %1310 = vmatpush1.msra.mxu0 0.0
    %1311 = vmatprep.subr.mxu0 0.0
    %1312 = vmatpush1.msra.mxu0 0.0
    %1313 = vmatprep.subr.mxu0 0.0
    %1314 = vmatpush1.msra.mxu0 0.0
    %1315 = vmatprep.subr.mxu0 0.0
    %1316 = vmatpush1.msra.mxu0 0.0
    %1317 = vmatprep.subr.mxu0 0.0
    %1318 = vmatpush1.msra.mxu0 0.0
    %1319 = vmatprep.subr.mxu0 0.0
    %1320 = vmatpush1.msra.mxu0 0.0
    %1321 = vmatprep.subr.mxu0 0.0
    %1322 = vmatpush1.msra.mxu0 0.0
    %1323 = vmatprep.subr.mxu0 0.0
    %1324 = vmatpush1.msra.mxu0 0.0
    %1325 = vmatprep.subr.mxu0 0.0
    %1326 = vmatpush1.msra.mxu0 0.0
    %1327 = vmatprep.subr.mxu0 0.0
    %1328 = vmatpush1.msra.mxu0 0.0
    %1329 = vmatprep.subr.mxu0 0.0
    %1330 = vmatpush1.msra.mxu0 0.0
    %1331 = vmatprep.subr.mxu0 0.0
    %1332 = vmatpush1.msra.mxu0 0.0
    %1333 = vmatprep.subr.mxu0 0.0
    %1334 = vmatpush1.msra.mxu0 0.0
    %1335 = vmatprep.subr.mxu0 0.0
    %1336 = vmatpush1.msra.mxu0 0.0
    %1337 = vmatprep.subr.mxu0 0.0
    %1338 = vmatpush1.msra.mxu0 0.0
    %1339 = vmatprep.subr.mxu0 0.0
    %1340 = vmatpush1.msra.mxu0 0.0
    %1341 = vmatprep.subr.mxu0 0.0
    %1342 = vmatpush1.msra.mxu0 0.0
    %1343 = vmatprep.subr.mxu0 0.0
    %1344 = vmatpush1.msra.mxu0 0.0
    %1345 = vmatprep.subr.mxu0 0.0
    %1346 = vmatpush1.msra.mxu0 0.0
    %1347 = vmatprep.subr.mxu0 0.0
    %1348 = vmatpush1.msra.mxu0 0.0
    %1349 = vmatprep.subr.mxu0 0.0
    %1350 = vmatpush1.msra.mxu0 0.0
    %1351 = vmatprep.subr.mxu0 0.0
    %1352 = vmatpush1.msra.mxu0 0.0
    %1353 = vmatprep.subr.mxu0 0.0
    %1354 = vmatpush1.msra.mxu0 0.0
    %1355 = vmatprep.subr.mxu0 0.0
    %1356 = vmatpush1.msra.mxu0 0.0
    %1357 = vmatprep.subr.mxu0 0.0
    %1358 = vmatpush1.msra.mxu0 0.0
    %1359 = vmatprep.mubr.f32.mxu0 0.0
    %1360 = vmatmul.mubr.f32.gmra.mrb[0].mxu0 %v1293
    %v1361 = vpop.f32.mrb[0].mxu0
    %v1362 = vadd.f32 0.0, %v1361
    %v1363 = vpop.f32.mrb[0].mxu0
    %1364 = vdwg.mxu0
    %1366 = vrot.lane.b32.xlu0 %v1122, 88
    %v1367 = vpop.permute.xlu0 %1366
    %v1368 = vsel %vm335, %v1367, 0
    %1370 = vmatprep.subr.mxu0 0.0
    %1371 = vmatpush1.xpose.msra.mxu0 %v782
    %1372 = vmatprep.subr.mxu0 0.0
    %1373 = vmatpush1.xpose.msra.mxu0 0.0
    %1374 = vmatprep.subr.mxu0 0.0
    %1375 = vmatpush1.xpose.msra.mxu0 0.0
    %1376 = vmatprep.subr.mxu0 0.0
    %1377 = vmatpush1.xpose.msra.mxu0 0.0
    %1378 = vmatprep.subr.mxu0 0.0
    %1379 = vmatpush1.xpose.msra.mxu0 0.0
    %1380 = vmatprep.subr.mxu0 0.0
    %1381 = vmatpush1.xpose.msra.mxu0 0.0
    %1382 = vmatprep.subr.mxu0 0.0
    %1383 = vmatpush1.xpose.msra.mxu0 0.0
    %1384 = vmatprep.subr.mxu0 0.0
    %1385 = vmatpush1.xpose.msra.mxu0 0.0
    %1386 = vmatprep.subr.mxu0 0.0
    %1387 = vmatpush1.xpose.msra.mxu0 0.0
    %1388 = vmatprep.subr.mxu0 0.0
    %1389 = vmatpush1.xpose.msra.mxu0 0.0
    %1390 = vmatprep.subr.mxu0 0.0
    %1391 = vmatpush1.xpose.msra.mxu0 0.0
    %1392 = vmatprep.subr.mxu0 0.0
    %1393 = vmatpush1.xpose.msra.mxu0 0.0
    %1394 = vmatprep.subr.mxu0 0.0
    %1395 = vmatpush1.xpose.msra.mxu0 0.0
    %1396 = vmatprep.subr.mxu0 0.0
    %1397 = vmatpush1.xpose.msra.mxu0 0.0
    %1398 = vmatprep.subr.mxu0 0.0
    %1399 = vmatpush1.xpose.msra.mxu0 0.0
    %1400 = vmatprep.subr.mxu0 0.0
    %1401 = vmatpush1.xpose.msra.mxu0 0.0
    %1402 = vmatprep.subr.mxu0 0.0
    %1403 = vmatpush1.xpose.msra.mxu0 0.0
    %1404 = vmatprep.subr.mxu0 0.0
    %1405 = vmatpush1.xpose.msra.mxu0 0.0
    %1406 = vmatprep.subr.mxu0 0.0
    %1407 = vmatpush1.xpose.msra.mxu0 0.0
    %1408 = vmatprep.subr.mxu0 0.0
    %1409 = vmatpush1.xpose.msra.mxu0 0.0
    %1410 = vmatprep.subr.mxu0 0.0
    %1411 = vmatpush1.xpose.msra.mxu0 0.0
    %1412 = vmatprep.subr.mxu0 0.0
    %1413 = vmatpush1.xpose.msra.mxu0 0.0
    %1414 = vmatprep.subr.mxu0 0.0
    %1415 = vmatpush1.xpose.msra.mxu0 0.0
    %1416 = vmatprep.subr.mxu0 0.0
    %1417 = vmatpush1.xpose.msra.mxu0 0.0
    %1418 = vmatprep.subr.mxu0 0.0
    %1419 = vmatpush1.xpose.msra.mxu0 0.0
    %1420 = vmatprep.subr.mxu0 0.0
    %1421 = vmatpush1.xpose.msra.mxu0 0.0
    %1422 = vmatprep.subr.mxu0 0.0
    %1423 = vmatpush1.xpose.msra.mxu0 0.0
    %1424 = vmatprep.subr.mxu0 0.0
    %1425 = vmatpush1.xpose.msra.mxu0 0.0
    %1426 = vmatprep.subr.mxu0 0.0
    %1427 = vmatpush1.xpose.msra.mxu0 0.0
    %1428 = vmatprep.subr.mxu0 0.0
    %1429 = vmatpush1.xpose.msra.mxu0 0.0
    %1430 = vmatprep.subr.mxu0 0.0
    %1431 = vmatpush1.xpose.msra.mxu0 0.0
    %1432 = vmatprep.subr.mxu0 0.0
    %1433 = vmatpush1.xpose.msra.mxu0 0.0
    %1434 = vmatprep.mubr.f32.mxu0 0.0
    %1435 = vmatmul.mubr.f32.gmra.mrb[0].mxu0 %v1368
    %v1436 = vpop.f32.mrb[0].mxu0
    %v1437 = vadd.f32 0.0, %v1436
    %v1438 = vpop.f32.mrb[0].mxu0
    %1439 = vdwg.mxu0
    %1440 = vrot.lane.b32.xlu0 %v192, 104
    %v1441 = vpop.permute.xlu0 %1440
    %1442 = vrot.lane.b32.xlu0 %v316, 96
    %v1443 = vpop.permute.xlu0 %1442
    %v1444 = vsel %vm205, %v1441, 0
    %v1446 = vsel %vm205, %v1443, 0
    %1448 = vmatprep.subr.mxu0 0.0
    %1449 = vmatpush1.xpose.msra.mxu0 %v1446
    %1450 = vmatprep.subr.mxu0 0.0
    %1451 = vmatpush1.xpose.msra.mxu0 0.0
    %1452 = vmatprep.subr.mxu0 0.0
    %1453 = vmatpush1.xpose.msra.mxu0 0.0
    %1454 = vmatprep.subr.mxu0 0.0
    %1455 = vmatpush1.xpose.msra.mxu0 0.0
    %1456 = vmatprep.subr.mxu0 0.0
    %1457 = vmatpush1.xpose.msra.mxu0 0.0
    %1458 = vmatprep.subr.mxu0 0.0
    %1459 = vmatpush1.xpose.msra.mxu0 0.0
    %1460 = vmatprep.subr.mxu0 0.0
    %1461 = vmatpush1.xpose.msra.mxu0 0.0
    %1462 = vmatprep.subr.mxu0 0.0
    %1463 = vmatpush1.xpose.msra.mxu0 0.0
    %1464 = vmatprep.subr.mxu0 0.0
    %1465 = vmatpush1.xpose.msra.mxu0 0.0
    %1466 = vmatprep.subr.mxu0 0.0
    %1467 = vmatpush1.xpose.msra.mxu0 0.0
    %1468 = vmatprep.subr.mxu0 0.0
    %1469 = vmatpush1.xpose.msra.mxu0 0.0
    %1470 = vmatprep.subr.mxu0 0.0
    %1471 = vmatpush1.xpose.msra.mxu0 0.0
    %1472 = vmatprep.subr.mxu0 0.0
    %1473 = vmatpush1.xpose.msra.mxu0 0.0
    %1474 = vmatprep.subr.mxu0 0.0
    %1475 = vmatpush1.xpose.msra.mxu0 0.0
    %1476 = vmatprep.subr.mxu0 0.0
    %1477 = vmatpush1.xpose.msra.mxu0 0.0
    %1478 = vmatprep.subr.mxu0 0.0
    %1479 = vmatpush1.xpose.msra.mxu0 0.0
    %1480 = vmatprep.subr.mxu0 0.0
    %1481 = vmatpush1.xpose.msra.mxu0 0.0
    %1482 = vmatprep.subr.mxu0 0.0
    %1483 = vmatpush1.xpose.msra.mxu0 0.0
    %1484 = vmatprep.subr.mxu0 0.0
    %1485 = vmatpush1.xpose.msra.mxu0 0.0
    %1486 = vmatprep.subr.mxu0 0.0
    %1487 = vmatpush1.xpose.msra.mxu0 0.0
    %1488 = vmatprep.subr.mxu0 0.0
    %1489 = vmatpush1.xpose.msra.mxu0 0.0
    %1490 = vmatprep.subr.mxu0 0.0
    %1491 = vmatpush1.xpose.msra.mxu0 0.0
    %1492 = vmatprep.subr.mxu0 0.0
    %1493 = vmatpush1.xpose.msra.mxu0 0.0
    %1494 = vmatprep.subr.mxu0 0.0
    %1495 = vmatpush1.xpose.msra.mxu0 0.0
    %1496 = vmatprep.subr.mxu0 0.0
    %1497 = vmatpush1.xpose.msra.mxu0 0.0
    %1498 = vmatprep.subr.mxu0 0.0
    %1499 = vmatpush1.xpose.msra.mxu0 0.0
    %1500 = vmatprep.subr.mxu0 0.0
    %1501 = vmatpush1.xpose.msra.mxu0 0.0
    %1502 = vmatprep.subr.mxu0 0.0
    %1503 = vmatpush1.xpose.msra.mxu0 0.0
    %1504 = vmatprep.subr.mxu0 0.0
    %1505 = vmatpush1.xpose.msra.mxu0 0.0
    %1506 = vmatprep.subr.mxu0 0.0
    %1507 = vmatpush1.xpose.msra.mxu0 0.0
    %1508 = vmatprep.subr.mxu0 0.0
    %1509 = vmatpush1.xpose.msra.mxu0 0.0
    %1510 = vmatprep.subr.mxu0 0.0
    %1511 = vmatpush1.xpose.msra.mxu0 0.0
    %1512 = vmatprep.mubr.f32.mxu0 0.0
    %1513 = vmatmul.mubr.f32.gmra.mrb[0].mxu0 %v1444
    %v1514 = vpop.f32.mrb[0].mxu0
    %v1515 = vadd.f32 %v1437, %v1514
    %v1516 = vpop.f32.mrb[0].mxu0
    %1517 = vdwg.mxu0
    %v1518 = vmul.f32 %v1515, 0.20412415
    %v1519 = vadd.f32 %v1518, %v77
    %v1520 = vsel %vm335, %v1519, -inf
    %1521 = vmax.xlane.f32.xlu0 %v1520
    %v1522 = vpop.xlane.xlu0 %1521
    %v1523 = vsub.f32 %v1519, %v1522
    %v1524 = vmul.f32 %v1523, 1.442695
    %v1525 = vpow.pop %v1524
    %v1526 = vsel %vm335, %v1525, 0.0
    %1527 = vadd.xlane.f32.xlu0 %v1526
    %v1528 = vpop.xlane.xlu0 %1527
    %v1529 = vrcp.pop %v1528
    %v1530 = vmul.f32 %v1525, %v1529
    %1531 = vrot.lane.b32.xlu0 %v316, 80
    %v1532 = vpop.permute.xlu0 %1531
    %v1535 = vsel %vm335, %v1530, 0
    %1537 = vmatprep.subr.mxu0 0.0
    %1538 = vmatpush1.msra.mxu0 %v1532
    %1539 = vmatprep.subr.mxu0 0.0
    %1540 = vmatpush1.msra.mxu0 0.0
    %1541 = vmatprep.subr.mxu0 0.0
    %1542 = vmatpush1.msra.mxu0 0.0
    %1543 = vmatprep.subr.mxu0 0.0
    %1544 = vmatpush1.msra.mxu0 0.0
    %1545 = vmatprep.subr.mxu0 0.0
    %1546 = vmatpush1.msra.mxu0 0.0
    %1547 = vmatprep.subr.mxu0 0.0
    %1548 = vmatpush1.msra.mxu0 0.0
    %1549 = vmatprep.subr.mxu0 0.0
    %1550 = vmatpush1.msra.mxu0 0.0
    %1551 = vmatprep.subr.mxu0 0.0
    %1552 = vmatpush1.msra.mxu0 0.0
    %1553 = vmatprep.subr.mxu0 0.0
    %1554 = vmatpush1.msra.mxu0 0.0
    %1555 = vmatprep.subr.mxu0 0.0
    %1556 = vmatpush1.msra.mxu0 0.0
    %1557 = vmatprep.subr.mxu0 0.0
    %1558 = vmatpush1.msra.mxu0 0.0
    %1559 = vmatprep.subr.mxu0 0.0
    %1560 = vmatpush1.msra.mxu0 0.0
    %1561 = vmatprep.subr.mxu0 0.0
    %1562 = vmatpush1.msra.mxu0 0.0
    %1563 = vmatprep.subr.mxu0 0.0
    %1564 = vmatpush1.msra.mxu0 0.0
    %1565 = vmatprep.subr.mxu0 0.0
    %1566 = vmatpush1.msra.mxu0 0.0
    %1567 = vmatprep.subr.mxu0 0.0
    %1568 = vmatpush1.msra.mxu0 0.0
    %1569 = vmatprep.subr.mxu0 0.0
    %1570 = vmatpush1.msra.mxu0 0.0
    %1571 = vmatprep.subr.mxu0 0.0
    %1572 = vmatpush1.msra.mxu0 0.0
    %1573 = vmatprep.subr.mxu0 0.0
    %1574 = vmatpush1.msra.mxu0 0.0
    %1575 = vmatprep.subr.mxu0 0.0
    %1576 = vmatpush1.msra.mxu0 0.0
    %1577 = vmatprep.subr.mxu0 0.0
    %1578 = vmatpush1.msra.mxu0 0.0
    %1579 = vmatprep.subr.mxu0 0.0
    %1580 = vmatpush1.msra.mxu0 0.0
    %1581 = vmatprep.subr.mxu0 0.0
    %1582 = vmatpush1.msra.mxu0 0.0
    %1583 = vmatprep.subr.mxu0 0.0
    %1584 = vmatpush1.msra.mxu0 0.0
    %1585 = vmatprep.subr.mxu0 0.0
    %1586 = vmatpush1.msra.mxu0 0.0
    %1587 = vmatprep.subr.mxu0 0.0
    %1588 = vmatpush1.msra.mxu0 0.0
    %1589 = vmatprep.subr.mxu0 0.0
    %1590 = vmatpush1.msra.mxu0 0.0
    %1591 = vmatprep.subr.mxu0 0.0
    %1592 = vmatpush1.msra.mxu0 0.0
    %1593 = vmatprep.subr.mxu0 0.0
    %1594 = vmatpush1.msra.mxu0 0.0
    %1595 = vmatprep.subr.mxu0 0.0
    %1596 = vmatpush1.msra.mxu0 0.0
    %1597 = vmatprep.subr.mxu0 0.0
    %1598 = vmatpush1.msra.mxu0 0.0
    %1599 = vmatprep.subr.mxu0 0.0
    %1600 = vmatpush1.msra.mxu0 0.0
    %1601 = vmatprep.mubr.f32.mxu0 0.0
    %1602 = vmatmul.mubr.f32.gmra.mrb[0].mxu0 %v1535
    %v1603 = vpop.f32.mrb[0].mxu0
    %v1604 = vadd.f32 0.0, %v1603
    %v1605 = vpop.f32.mrb[0].mxu0
    %1606 = vdwg.mxu0
    %v1607 = vld [vmem:[%s10 + $0x10] sm:$0xff]
    %v1608 = vld [vmem:[%s10 + $0x18] sm:$0xff]
    %v1610 = vsel %vm205, %v1362, 0
    %v1613 = vsel %vm205, %v1604, 0
    %1615 = vmatprep.subr.mxu0 0.0
    %1616 = vmatpush1.msra.mxu0 %v1607
    %1617 = vmatprep.subr.mxu0 0.0
    %1618 = vmatpush1.msra.mxu0 %v1608
    %1619 = vmatprep.subr.mxu0 0.0
    %1620 = vmatpush1.msra.mxu0 0.0
    %1621 = vmatprep.subr.mxu0 0.0
    %1622 = vmatpush1.msra.mxu0 0.0
    %1623 = vmatprep.subr.mxu0 0.0
    %1624 = vmatpush1.msra.mxu0 0.0
    %1625 = vmatprep.subr.mxu0 0.0
    %1626 = vmatpush1.msra.mxu0 0.0
    %1627 = vmatprep.subr.mxu0 0.0
    %1628 = vmatpush1.msra.mxu0 0.0
    %1629 = vmatprep.subr.mxu0 0.0
    %1630 = vmatpush1.msra.mxu0 0.0
    %1631 = vmatprep.subr.mxu0 0.0
    %1632 = vmatpush1.msra.mxu0 0.0
    %1633 = vmatprep.subr.mxu0 0.0
    %1634 = vmatpush1.msra.mxu0 0.0
    %1635 = vmatprep.subr.mxu0 0.0
    %1636 = vmatpush1.msra.mxu0 0.0
    %1637 = vmatprep.subr.mxu0 0.0
    %1638 = vmatpush1.msra.mxu0 0.0
    %1639 = vmatprep.subr.mxu0 0.0
    %1640 = vmatpush1.msra.mxu0 0.0
    %1641 = vmatprep.subr.mxu0 0.0
    %1642 = vmatpush1.msra.mxu0 0.0
    %1643 = vmatprep.subr.mxu0 0.0
    %1644 = vmatpush1.msra.mxu0 0.0
    %1645 = vmatprep.subr.mxu0 0.0
    %1646 = vmatpush1.msra.mxu0 0.0
    %1647 = vmatprep.subr.mxu0 0.0
    %1648 = vmatpush1.msra.mxu0 0.0
    %1649 = vmatprep.subr.mxu0 0.0
    %1650 = vmatpush1.msra.mxu0 0.0
    %1651 = vmatprep.subr.mxu0 0.0
    %1652 = vmatpush1.msra.mxu0 0.0
    %1653 = vmatprep.subr.mxu0 0.0
    %1654 = vmatpush1.msra.mxu0 0.0
    %1655 = vmatprep.subr.mxu0 0.0
    %1656 = vmatpush1.msra.mxu0 0.0
    %1657 = vmatprep.subr.mxu0 0.0
    %1658 = vmatpush1.msra.mxu0 0.0
    %1659 = vmatprep.subr.mxu0 0.0
    %1660 = vmatpush1.msra.mxu0 0.0
    %1661 = vmatprep.subr.mxu0 0.0
    %1662 = vmatpush1.msra.mxu0 0.0
    %1663 = vmatprep.subr.mxu0 0.0
    %1664 = vmatpush1.msra.mxu0 0.0
    %1665 = vmatprep.subr.mxu0 0.0
    %1666 = vmatpush1.msra.mxu0 0.0
    %1667 = vmatprep.subr.mxu0 0.0
    %1668 = vmatpush1.msra.mxu0 0.0
    %1669 = vmatprep.subr.mxu0 0.0
    %1670 = vmatpush1.msra.mxu0 0.0
    %1671 = vmatprep.subr.mxu0 0.0
    %1672 = vmatpush1.msra.mxu0 0.0
    %1673 = vmatprep.subr.mxu0 0.0
    %1674 = vmatpush1.msra.mxu0 0.0
    %1675 = vmatprep.subr.mxu0 0.0
    %1676 = vmatpush1.msra.mxu0 0.0
    %1677 = vmatprep.subr.mxu0 0.0
    %1678 = vmatpush1.msra.mxu0 0.0
    %1679 = vmatprep.mubr.f32.mxu0 0.0
    %1680 = vmatmul.mubr.f32.gmra.mrb[0].mxu0 %v1610
    %v1681 = vpop.f32.mrb[0].mxu0
    %v1682 = vadd.f32 0.0, %v1681
    %v1683 = vpop.f32.mrb[0].mxu0
    %1684 = vmatprep.mubr.f32.mxu0 0.0
    %1685 = vmatmul.mubr.f32.gmra.mrb[0].mxu0 %v1613
    %v1686 = vpop.f32.mrb[0].mxu0
    %v1687 = vadd.f32 0.0, %v1686
    %v1688 = vpop.f32.mrb[0].mxu0
    %1689 = vdwg.mxu0
    %v1691 = vsel %vm205, %v771, 0
    %v1694 = vsel %vm205, %v1015, 0
    %1696 = vmatprep.subr.mxu0 0.0
    %1697 = vmatpush1.msra.mxu0 %v1018
    %1698 = vmatprep.subr.mxu0 0.0
    %1699 = vmatpush1.msra.mxu0 %v1019
    %1700 = vmatprep.subr.mxu0 0.0
    %1701 = vmatpush1.msra.mxu0 0.0
    %1702 = vmatprep.subr.mxu0 0.0
    %1703 = vmatpush1.msra.mxu0 0.0
    %1704 = vmatprep.subr.mxu0 0.0
    %1705 = vmatpush1.msra.mxu0 0.0
    %1706 = vmatprep.subr.mxu0 0.0
    %1707 = vmatpush1.msra.mxu0 0.0
    %1708 = vmatprep.subr.mxu0 0.0
    %1709 = vmatpush1.msra.mxu0 0.0
    %1710 = vmatprep.subr.mxu0 0.0
    %1711 = vmatpush1.msra.mxu0 0.0
    %1712 = vmatprep.subr.mxu0 0.0
    %1713 = vmatpush1.msra.mxu0 0.0
    %1714 = vmatprep.subr.mxu0 0.0
    %1715 = vmatpush1.msra.mxu0 0.0
    %1716 = vmatprep.subr.mxu0 0.0
    %1717 = vmatpush1.msra.mxu0 0.0
    %1718 = vmatprep.subr.mxu0 0.0
    %1719 = vmatpush1.msra.mxu0 0.0
    %1720 = vmatprep.subr.mxu0 0.0
    %1721 = vmatpush1.msra.mxu0 0.0
    %1722 = vmatprep.subr.mxu0 0.0
    %1723 = vmatpush1.msra.mxu0 0.0
    %1724 = vmatprep.subr.mxu0 0.0
    %1725 = vmatpush1.msra.mxu0 0.0
    %1726 = vmatprep.subr.mxu0 0.0
    %1727 = vmatpush1.msra.mxu0 0.0
    %1728 = vmatprep.subr.mxu0 0.0
    %1729 = vmatpush1.msra.mxu0 0.0
    %1730 = vmatprep.subr.mxu0 0.0
    %1731 = vmatpush1.msra.mxu0 0.0
    %1732 = vmatprep.subr.mxu0 0.0
    %1733 = vmatpush1.msra.mxu0 0.0
    %1734 = vmatprep.subr.mxu0 0.0
    %1735 = vmatpush1.msra.mxu0 0.0
    %1736 = vmatprep.subr.mxu0 0.0
    %1737 = vmatpush1.msra.mxu0 0.0
    %1738 = vmatprep.subr.mxu0 0.0
    %1739 = vmatpush1.msra.mxu0 0.0
    %1740 = vmatprep.subr.mxu0 0.0
    %1741 = vmatpush1.msra.mxu0 0.0
    %1742 = vmatprep.subr.mxu0 0.0
    %1743 = vmatpush1.msra.mxu0 0.0
    %1744 = vmatprep.subr.mxu0 0.0
    %1745 = vmatpush1.msra.mxu0 0.0
    %1746 = vmatprep.subr.mxu0 0.0
    %1747 = vmatpush1.msra.mxu0 0.0
    %1748 = vmatprep.subr.mxu0 0.0
    %1749 = vmatpush1.msra.mxu0 0.0
    %1750 = vmatprep.subr.mxu0 0.0
    %1751 = vmatpush1.msra.mxu0 0.0
    %1752 = vmatprep.subr.mxu0 0.0
    %1753 = vmatpush1.msra.mxu0 0.0
    %1754 = vmatprep.subr.mxu0 0.0
    %1755 = vmatpush1.msra.mxu0 0.0
    %1756 = vmatprep.subr.mxu0 0.0
    %1757 = vmatpush1.msra.mxu0 0.0
    %1758 = vmatprep.subr.mxu0 0.0
    %1759 = vmatpush1.msra.mxu0 0.0
    %1760 = vmatprep.mubr.f32.mxu0 0.0
    %1761 = vmatmul.mubr.f32.gmra.mrb[0].mxu0 %v1691
    %v1762 = vpop.f32.mrb[0].mxu0
    %v1763 = vadd.f32 %v1682, %v1762
    %v1764 = vpop.f32.mrb[0].mxu0
    %1765 = vmatprep.mubr.f32.mxu0 0.0
    %1766 = vmatmul.mubr.f32.gmra.mrb[0].mxu0 %v1694
    %v1767 = vpop.f32.mrb[0].mxu0
    %v1768 = vadd.f32 %v1687, %v1767
    %v1769 = vpop.f32.mrb[0].mxu0
    %1770 = vdwg.mxu0
    %v1771 = vmul.f32 %v1763, %v1763
    %v1772 = vmul.f32 %v1768, %v1768
    %v1773 = vsel %vm85, %v1771, 0.0
    %1774 = vadd.xlane.f32.xlu0 %v1773
    %v1775 = vpop.xlane.xlu0 %1774
    %v1776 = vsel %vm85, %v1772, 0.0
    %1777 = vadd.xlane.f32.xlu0 %v1776
    %v1778 = vpop.xlane.xlu0 %1777
    %v1779 = vadd.f32 %v1775, 1.0
    %v1780 = vadd.f32 %v1778, 1.0
    %v1781 = vrsqrt.pop %v1779
    %v1782 = vmul.f32 %v1779, %v1781
    %vm1783 = vcmp.eq.f32.partialorder %v1779, inf
    %v1784 = vsel %vm1783, %v1779, %v1782
    %vm1785 = vcmp.eq.f32.partialorder %v1779, 0.0
    %v1786 = vand.u32 %v1779, 2147483648
    %v1787 = vsel %vm1785, %v1786, %v1784
    %v1788 = vrsqrt.pop %v1780
    %v1789 = vmul.f32 %v1780, %v1788
    %vm1790 = vcmp.eq.f32.partialorder %v1780, inf
    %v1791 = vsel %vm1790, %v1780, %v1789
    %vm1792 = vcmp.eq.f32.partialorder %v1780, 0.0
    %v1793 = vand.u32 %v1780, 2147483648
    %v1794 = vsel %vm1792, %v1793, %v1791
    %v1795 = vmul.f32 %v1763, 0.17407766
    %v1796 = vmul.f32 %v1768, 0.17407766
    %v1797 = vadd.f32 %v75, %v1795
    %v1798 = vadd.f32 %v76, %v1796
    %v1799 = vmul.f32 %v1787, 0.17407766
    %v1800 = vmul.f32 %v1794, 0.17407766
    %v1801 = vadd.f32 %v73, %v1799
    %v1802 = vadd.f32 %v74, %v1800
    %v1803 = vmul.f32 %v1797, %v1797
    %v1804 = vmul.f32 %v1798, %v1798
    %v1805 = vsel %vm85, %v1803, 0.0
    %1806 = vadd.xlane.f32.xlu0 %v1805
    %v1807 = vpop.xlane.xlu0 %1806
    %v1808 = vsel %vm85, %v1804, 0.0
    %1809 = vadd.xlane.f32.xlu0 %v1808
    %v1810 = vpop.xlane.xlu0 %1809
    %v1811 = vmul.f32 %v1801, %v1801
    %v1812 = vmul.f32 %v1802, %v1802
    %v1813 = vsub.f32 %v1807, %v1811
    %v1814 = vsub.f32 %v1810, %v1812
    %v1815 = vsub.f32 0.0, %v1813
    %v1816 = vsub.f32 0.0, %v1814
    %v1817 = vmax.f32 %v1815, 1e-08
    %v1818 = vmax.f32 %v1816, 1e-08
    %v1819 = vrsqrt.pop %v1817
    %v1820 = vmul.f32 %v1817, %v1819
    %vm1821 = vcmp.eq.f32.partialorder %v1817, inf
    %v1822 = vsel %vm1821, %v1817, %v1820
    %vm1823 = vcmp.eq.f32.partialorder %v1817, 0.0
    %v1824 = vand.u32 %v1817, 2147483648
    %v1825 = vsel %vm1823, %v1824, %v1822
    %v1826 = vrsqrt.pop %v1818
    %v1827 = vmul.f32 %v1818, %v1826
    %vm1828 = vcmp.eq.f32.partialorder %v1818, inf
    %v1829 = vsel %vm1828, %v1818, %v1827
    %vm1830 = vcmp.eq.f32.partialorder %v1818, 0.0
    %v1831 = vand.u32 %v1818, 2147483648
    %v1832 = vsel %vm1830, %v1831, %v1829
    %1834 = vset.pattern.permute.xlu0 0
    %1835 = vperm.xlu0 %1834, %v1825
    %v1836 = vpop.permute.xlu0 %1835
    %1839 = vset.pattern.permute.xlu0 0
    %1840 = vperm.xlu0 %1839, %v1832
    %v1841 = vpop.permute.xlu0 %1840
    %v1843 = vrcp.pop %v1836
    %v1844 = vmul.f32 %v1797, %v1843
    %v1845 = vrcp.pop %v1841
    %v1846 = vmul.f32 %v1798, %v1845
    %v1847 = vrcp.pop %v1825
    %v1848 = vmul.f32 %v1801, %v1847
    %v1849 = vrcp.pop %v1832
    %v1850 = vmul.f32 %v1802, %v1849
    %v1851 = vmul.f32 %v1844, %v1844
    %v1852 = vmul.f32 %v1846, %v1846
    %v1853 = vsel %vm85, %v1851, 0.0
    %1854 = vadd.xlane.f32.xlu0 %v1853
    %v1855 = vpop.xlane.xlu0 %1854
    %v1856 = vsel %vm85, %v1852, 0.0
    %1857 = vadd.xlane.f32.xlu0 %v1856
    %v1858 = vpop.xlane.xlu0 %1857
    %v1859 = vmul.f32 %v1855, %v92
    %v1860 = vmul.f32 %v1858, %v92
    %v1861 = vadd.f32 %v1859, 1e-06
    %v1862 = vadd.f32 %v1860, 1e-06
    %v1863 = vrsqrt.pop %v1861
    %v1864 = vrsqrt.pop %v1862
    %v1865 = vmul.f32 %v1844, %v1863
    %v1866 = vmul.f32 %v1846, %v1864
    %v1867 = vld [vmem:[%s11] sm:$0x1]
    %v1869 = vlaneseq
    %v1870 = vshrl.u32 %v1869, 7
    %v1871 = vsub.s32 0, %v1870
    %v1872 = vrot.slane %v1867, %v1871
    %v1874 = vmul.f32 %v1865, %v1872
    %v1875 = vmul.f32 %v1866, %v1872
    %v1876 = vld [vmem:[%s12] sm:$0xff]
    %v1877 = vld [vmem:[%s12 + $0x8] sm:$0xff]
    %v1878 = vld [vmem:[%s12 + $0x10] sm:$0xff]
    %v1879 = vld [vmem:[%s12 + $0x18] sm:$0xff]
    %v1881 = vsel %vm85, %v1874, 0
    %v1884 = vsel %vm85, %v1875, 0
    %1886 = vmatprep.subr.mxu0 0.0
    %1887 = vmatpush1.msra.mxu0 %v1876
    %1888 = vmatprep.subr.mxu0 0.0
    %1889 = vmatpush1.msra.mxu0 %v1877
    %1890 = vmatprep.subr.mxu0 0.0
    %1891 = vmatpush1.msra.mxu0 %v1878
    %1892 = vmatprep.subr.mxu0 0.0
    %1893 = vmatpush1.msra.mxu0 %v1879
    %1894 = vmatprep.subr.mxu0 0.0
    %1895 = vmatpush1.msra.mxu0 0.0
    %1896 = vmatprep.subr.mxu0 0.0
    %1897 = vmatpush1.msra.mxu0 0.0
    %1898 = vmatprep.subr.mxu0 0.0
    %1899 = vmatpush1.msra.mxu0 0.0
    %1900 = vmatprep.subr.mxu0 0.0
    %1901 = vmatpush1.msra.mxu0 0.0
    %1902 = vmatprep.subr.mxu0 0.0
    %1903 = vmatpush1.msra.mxu0 0.0
    %1904 = vmatprep.subr.mxu0 0.0
    %1905 = vmatpush1.msra.mxu0 0.0
    %1906 = vmatprep.subr.mxu0 0.0
    %1907 = vmatpush1.msra.mxu0 0.0
    %1908 = vmatprep.subr.mxu0 0.0
    %1909 = vmatpush1.msra.mxu0 0.0
    %1910 = vmatprep.subr.mxu0 0.0
    %1911 = vmatpush1.msra.mxu0 0.0
    %1912 = vmatprep.subr.mxu0 0.0
    %1913 = vmatpush1.msra.mxu0 0.0
    %1914 = vmatprep.subr.mxu0 0.0
    %1915 = vmatpush1.msra.mxu0 0.0
    %1916 = vmatprep.subr.mxu0 0.0
    %1917 = vmatpush1.msra.mxu0 0.0
    %1918 = vmatprep.subr.mxu0 0.0
    %1919 = vmatpush1.msra.mxu0 0.0
    %1920 = vmatprep.subr.mxu0 0.0
    %1921 = vmatpush1.msra.mxu0 0.0
    %1922 = vmatprep.subr.mxu0 0.0
    %1923 = vmatpush1.msra.mxu0 0.0
    %1924 = vmatprep.subr.mxu0 0.0
    %1925 = vmatpush1.msra.mxu0 0.0
    %1926 = vmatprep.subr.mxu0 0.0
    %1927 = vmatpush1.msra.mxu0 0.0
    %1928 = vmatprep.subr.mxu0 0.0
    %1929 = vmatpush1.msra.mxu0 0.0
    %1930 = vmatprep.subr.mxu0 0.0
    %1931 = vmatpush1.msra.mxu0 0.0
    %1932 = vmatprep.subr.mxu0 0.0
    %1933 = vmatpush1.msra.mxu0 0.0
    %1934 = vmatprep.subr.mxu0 0.0
    %1935 = vmatpush1.msra.mxu0 0.0
    %1936 = vmatprep.subr.mxu0 0.0
    %1937 = vmatpush1.msra.mxu0 0.0
    %1938 = vmatprep.subr.mxu0 0.0
    %1939 = vmatpush1.msra.mxu0 0.0
    %1940 = vmatprep.subr.mxu0 0.0
    %1941 = vmatpush1.msra.mxu0 0.0
    %1942 = vmatprep.subr.mxu0 0.0
    %1943 = vmatpush1.msra.mxu0 0.0
    %1944 = vmatprep.subr.mxu0 0.0
    %1945 = vmatpush1.msra.mxu0 0.0
    %1946 = vmatprep.subr.mxu0 0.0
    %1947 = vmatpush1.msra.mxu0 0.0
    %1948 = vmatprep.subr.mxu0 0.0
    %1949 = vmatpush1.msra.mxu0 0.0
    %1950 = vmatprep.mubr.f32.mxu0 0.0
    %1951 = vmatmul.mubr.f32.gmra.mrb[0].mxu0 %v1881
    %v1952 = vpop.f32.mrb[0].mxu0
    %v1953 = vadd.f32 0.0, %v1952
    %v1954 = vpop.f32.mrb[0].mxu0
    %1955 = vmatprep.mubr.f32.mxu0 0.0
    %1956 = vmatmul.mubr.f32.gmra.mrb[0].mxu0 %v1884
    %v1957 = vpop.f32.mrb[0].mxu0
    %v1958 = vadd.f32 0.0, %v1957
    %v1959 = vpop.f32.mrb[0].mxu0
    %1960 = vdwg.mxu0
    %v1961 = vsub.f32 0.0, %v1953
    %v1962 = vsub.f32 0.0, %v1958
    %v1963 = vmul.f32 %v1961, 1.442695
    %v1964 = vpow.pop %v1963
    %v1965 = vmul.f32 %v1962, 1.442695
    %v1966 = vpow.pop %v1965
    %v1967 = vadd.f32 %v1964, 1.0
    %v1968 = vadd.f32 %v1966, 1.0
    %v1969 = vrcp.pop %v1967
    %v1970 = vmul.f32 1.0, %v1969
    %v1971 = vrcp.pop %v1968
    %v1972 = vmul.f32 1.0, %v1971
    %v1973 = vmul.f32 %v1953, %v1970
    %v1974 = vmul.f32 %v1958, %v1972
    %1977 = vrot.lane.b32.xlu0 %v1953, 64
    %v1978 = vpop.permute.xlu0 %1977
    %1979 = vrot.lane.b32.xlu0 %v1958, 64
    %v1980 = vpop.permute.xlu0 %1979
    %v1983 = vmul.f32 %v1973, %v1978
    %v1984 = vmul.f32 %v1974, %v1980
    %v1985 = vld [vmem:[%s13] sm:$0xff]
    %v1986 = vld [vmem:[%s13 + $0x8] sm:$0xff]
    %v1987 = vld [vmem:[%s13 + $0x10] sm:$0xff]
    %v1988 = vld [vmem:[%s13 + $0x18] sm:$0xff]
    %v1989 = vld [vmem:[%s13 + $0x20] sm:$0xff]
    %v1990 = vld [vmem:[%s13 + $0x28] sm:$0xff]
    %v1991 = vld [vmem:[%s13 + $0x30] sm:$0xff]
    %v1992 = vld [vmem:[%s13 + $0x38] sm:$0xff]
    %vm1993 = vcmask 523264
    %v1995 = vsel %vm1993, %v1983, 0
    %v1998 = vsel %vm1993, %v1984, 0
    %2000 = vmatprep.subr.mxu0 0.0
    %2001 = vmatpush1.msra.mxu0 %v1985
    %2002 = vmatprep.subr.mxu0 0.0
    %2003 = vmatpush1.msra.mxu0 %v1986
    %2004 = vmatprep.subr.mxu0 0.0
    %2005 = vmatpush1.msra.mxu0 %v1987
    %2006 = vmatprep.subr.mxu0 0.0
    %2007 = vmatpush1.msra.mxu0 %v1988
    %2008 = vmatprep.subr.mxu0 0.0
    %2009 = vmatpush1.msra.mxu0 %v1989
    %2010 = vmatprep.subr.mxu0 0.0
    %2011 = vmatpush1.msra.mxu0 %v1990
    %2012 = vmatprep.subr.mxu0 0.0
    %2013 = vmatpush1.msra.mxu0 %v1991
    %2014 = vmatprep.subr.mxu0 0.0
    %2015 = vmatpush1.msra.mxu0 %v1992
    %2016 = vmatprep.subr.mxu0 0.0
    %2017 = vmatpush1.msra.mxu0 0.0
    %2018 = vmatprep.subr.mxu0 0.0
    %2019 = vmatpush1.msra.mxu0 0.0
    %2020 = vmatprep.subr.mxu0 0.0
    %2021 = vmatpush1.msra.mxu0 0.0
    %2022 = vmatprep.subr.mxu0 0.0
    %2023 = vmatpush1.msra.mxu0 0.0
    %2024 = vmatprep.subr.mxu0 0.0
    %2025 = vmatpush1.msra.mxu0 0.0
    %2026 = vmatprep.subr.mxu0 0.0
    %2027 = vmatpush1.msra.mxu0 0.0
    %2028 = vmatprep.subr.mxu0 0.0
    %2029 = vmatpush1.msra.mxu0 0.0
    %2030 = vmatprep.subr.mxu0 0.0
    %2031 = vmatpush1.msra.mxu0 0.0
    %2032 = vmatprep.subr.mxu0 0.0
    %2033 = vmatpush1.msra.mxu0 0.0
    %2034 = vmatprep.subr.mxu0 0.0
    %2035 = vmatpush1.msra.mxu0 0.0
    %2036 = vmatprep.subr.mxu0 0.0
    %2037 = vmatpush1.msra.mxu0 0.0
    %2038 = vmatprep.subr.mxu0 0.0
    %2039 = vmatpush1.msra.mxu0 0.0
    %2040 = vmatprep.subr.mxu0 0.0
    %2041 = vmatpush1.msra.mxu0 0.0
    %2042 = vmatprep.subr.mxu0 0.0
    %2043 = vmatpush1.msra.mxu0 0.0
    %2044 = vmatprep.subr.mxu0 0.0
    %2045 = vmatpush1.msra.mxu0 0.0
    %2046 = vmatprep.subr.mxu0 0.0
    %2047 = vmatpush1.msra.mxu0 0.0
    %2048 = vmatprep.subr.mxu0 0.0
    %2049 = vmatpush1.msra.mxu0 0.0
    %2050 = vmatprep.subr.mxu0 0.0
    %2051 = vmatpush1.msra.mxu0 0.0
    %2052 = vmatprep.subr.mxu0 0.0
    %2053 = vmatpush1.msra.mxu0 0.0
    %2054 = vmatprep.subr.mxu0 0.0
    %2055 = vmatpush1.msra.mxu0 0.0
    %2056 = vmatprep.subr.mxu0 0.0
    %2057 = vmatpush1.msra.mxu0 0.0
    %2058 = vmatprep.subr.mxu0 0.0
    %2059 = vmatpush1.msra.mxu0 0.0
    %2060 = vmatprep.subr.mxu0 0.0
    %2061 = vmatpush1.msra.mxu0 0.0
    %2062 = vmatprep.subr.mxu0 0.0
    %2063 = vmatpush1.msra.mxu0 0.0
    %2064 = vmatprep.mubr.f32.mxu0 0.0
    %2065 = vmatmul.mubr.f32.gmra.mrb[0].mxu0 %v1995
    %v2066 = vpop.f32.mrb[0].mxu0
    %v2067 = vadd.f32 0.0, %v2066
    %v2068 = vpop.f32.mrb[0].mxu0
    %2069 = vmatprep.mubr.f32.mxu0 0.0
    %2070 = vmatmul.mubr.f32.gmra.mrb[0].mxu0 %v1998
    %v2071 = vpop.f32.mrb[0].mxu0
    %v2072 = vadd.f32 0.0, %v2071
    %v2073 = vpop.f32.mrb[0].mxu0
    %2074 = vdwg.mxu0
    %v2075 = vmul.f32 %v2067, %v2067
    %v2076 = vmul.f32 %v2072, %v2072
    %v2077 = vsel %vm85, %v2075, 0.0
    %2078 = vadd.xlane.f32.xlu0 %v2077
    %v2079 = vpop.xlane.xlu0 %2078
    %v2080 = vsel %vm85, %v2076, 0.0
    %2081 = vadd.xlane.f32.xlu0 %v2080
    %v2082 = vpop.xlane.xlu0 %2081
    %v2083 = vadd.f32 %v2079, 1.0
    %v2084 = vadd.f32 %v2082, 1.0
    %v2085 = vrsqrt.pop %v2083
    %v2086 = vmul.f32 %v2083, %v2085
    %vm2087 = vcmp.eq.f32.partialorder %v2083, inf
    %v2088 = vsel %vm2087, %v2083, %v2086
    %vm2089 = vcmp.eq.f32.partialorder %v2083, 0.0
    %v2090 = vand.u32 %v2083, 2147483648
    %v2091 = vsel %vm2089, %v2090, %v2088
    %v2092 = vrsqrt.pop %v2084
    %v2093 = vmul.f32 %v2084, %v2092
    %vm2094 = vcmp.eq.f32.partialorder %v2084, inf
    %v2095 = vsel %vm2094, %v2084, %v2093
    %vm2096 = vcmp.eq.f32.partialorder %v2084, 0.0
    %v2097 = vand.u32 %v2084, 2147483648
    %v2098 = vsel %vm2096, %v2097, %v2095
    %v2099 = vmul.f32 %v2067, 0.17407766
    %v2100 = vmul.f32 %v2072, 0.17407766
    %v2101 = vadd.f32 %v1844, %v2099
    %v2102 = vadd.f32 %v1846, %v2100
    %v2103 = vmul.f32 %v2091, 0.17407766
    %v2104 = vmul.f32 %v2098, 0.17407766
    %v2105 = vadd.f32 %v1848, %v2103
    %v2106 = vadd.f32 %v1850, %v2104
    %v2107 = vmul.f32 %v2101, %v2101
    %v2108 = vmul.f32 %v2102, %v2102
    %v2109 = vsel %vm85, %v2107, 0.0
    %2110 = vadd.xlane.f32.xlu0 %v2109
    %v2111 = vpop.xlane.xlu0 %2110
    %v2112 = vsel %vm85, %v2108, 0.0
    %2113 = vadd.xlane.f32.xlu0 %v2112
    %v2114 = vpop.xlane.xlu0 %2113
    %v2115 = vmul.f32 %v2105, %v2105
    %v2116 = vmul.f32 %v2106, %v2106
    %v2117 = vsub.f32 %v2111, %v2115
    %v2118 = vsub.f32 %v2114, %v2116
    %v2119 = vsub.f32 0.0, %v2117
    %v2120 = vsub.f32 0.0, %v2118
    %v2121 = vmax.f32 %v2119, 1e-08
    %v2122 = vmax.f32 %v2120, 1e-08
    %v2123 = vrsqrt.pop %v2121
    %v2124 = vmul.f32 %v2121, %v2123
    %vm2125 = vcmp.eq.f32.partialorder %v2121, inf
    %v2126 = vsel %vm2125, %v2121, %v2124
    %vm2127 = vcmp.eq.f32.partialorder %v2121, 0.0
    %v2128 = vand.u32 %v2121, 2147483648
    %v2129 = vsel %vm2127, %v2128, %v2126
    %v2130 = vrsqrt.pop %v2122
    %v2131 = vmul.f32 %v2122, %v2130
    %vm2132 = vcmp.eq.f32.partialorder %v2122, inf
    %v2133 = vsel %vm2132, %v2122, %v2131
    %vm2134 = vcmp.eq.f32.partialorder %v2122, 0.0
    %v2135 = vand.u32 %v2122, 2147483648
    %v2136 = vsel %vm2134, %v2135, %v2133
    %2138 = vset.pattern.permute.xlu0 0
    %2139 = vperm.xlu0 %2138, %v2129
    %v2140 = vpop.permute.xlu0 %2139
    %2143 = vset.pattern.permute.xlu0 0
    %2144 = vperm.xlu0 %2143, %v2136
    %v2145 = vpop.permute.xlu0 %2144
    %v2147 = vrcp.pop %v2140
    %v2148 = vmul.f32 %v2101, %v2147
    %v2149 = vrcp.pop %v2145
    %v2150 = vmul.f32 %v2102, %v2149
    %2151 = vst.msk [vmem:[%s15] sm:$0xff] %vm85, %v2148
    %2152 = vst.msk [vmem:[%s15 + $0x8] sm:$0xff] %vm85, %v2150
    %v2153 = vrcp.pop %v2129
    %v2154 = vmul.f32 %v2105, %v2153
    %v2155 = vrcp.pop %v2136
    %v2156 = vmul.f32 %v2106, %v2155
    %vm2157 = vcmask 7168
    %2158 = vst.msk [vmem:[%s14] sm:$0xff] %vm2157, %v2154
    %2159 = vst.msk [vmem:[%s14 + $0x8] sm:$0xff] %vm2157, %v2156
    // Predicated region
    $region66: #{_lambda_.1} parent=1 // pred_check
      _
    $region67: #{_lambda_.1} parent=1 // pred_check_branch
      %2161 = sbr.rel (0) target = $region69
    $region68: #{_lambda_.1} parent=1 // pred_region
      _
    $region69: #{_lambda_.1} parent=1 // pred_fallthru
      _
    // Predicated region
    $region70: #{_lambda_.1} parent=1 // pred_check
      _
    $region71: #{_lambda_.1} parent=1 // pred_check_branch
      %2163 = sbr.rel (0) target = $region73
    $region72: #{_lambda_.1} parent=1 // pred_region
      _
    $region73: #{_lambda_.1} parent=1 // pred_fallthru
      _
    // Predicated region
    $region74: #{_lambda_.1} parent=1 // pred_check
      _
    $region75: #{_lambda_.1} parent=1 // pred_check_branch
      %2165 = sbr.rel (0) target = $region77
    $region76: #{_lambda_.1} parent=1 // pred_region
      _
    $region77: #{_lambda_.1} parent=1 // pred_fallthru
      _
    // Predicated region
    $region78: #{_lambda_.1} parent=1 // pred_check
      _
    $region79: #{_lambda_.1} parent=1 // pred_check_branch
      %2167 = sbr.rel (0) target = $region81
    $region80: #{_lambda_.1} parent=1 // pred_region
      _
    $region81: #{_lambda_.1} parent=1 // pred_fallthru
      _
    %2168 = vsyncpa [#allocation3], 1
    %2169 = vsyncpa [#allocation5], 1

</llo_original>
